<compile_context>
chip_gen: v7x
topology: tpu7x:2x2x1
jax: 0.10.0
libtpu: 0.0.40
codegen_flags: <defaults>
</compile_context>

<pallas_src>
import jax
import jax.numpy as jnp
from jax.experimental import pallas as pl
from jax.experimental.pallas import tpu as pltpu

N_INPUT = 2
N_HIDDEN = 64
N_OUT = 2

H_PAD = 128      # hidden padded to one full 128-lane vreg per gate
N_OUT_PAD = 128  # lane-dense output store; real outputs live in lanes [0, 2)


def _round_up(x, m):
    return (x + m - 1) // m * m


def _lstm_kernel(x_ref, wih_ref, whh_ref, b_ref, wout_ref, bout_ref,
                 out_ref, xproj_ref):
    """One batch tile, whole sequence, everything VMEM-resident.

    x_ref     : (T, BT, N_INPUT)      time-major inputs for this batch tile
    wih_ref   : (N_INPUT, 4*H_PAD)    W_ih^T, per-gate zero-padded to H_PAD
    whh_ref   : (H_PAD, 4*H_PAD)      W_hh^T, zero-padded (rows & per-gate cols)
    b_ref     : (1, 4*H_PAD)          b_ih + b_hh, zero-padded
    wout_ref  : (H_PAD, N_OUT_PAD)    linear.weight^T, zero-padded
    bout_ref  : (1, N_OUT_PAD)        linear.bias, zero-padded
    out_ref   : (BT, N_OUT_PAD)       linear(h_T)
    xproj_ref : (T, BT, 4*H_PAD)      VMEM scratch: precomputed input proj.
    """
    T, BT, _ = x_ref.shape
    Hp = whh_ref.shape[0]

    # Hoisted out of the recurrence: one matmul for every timestep's input
    # projection, with the (pre-summed) bias folded in.  Layout note: the
    # reshapes only touch the major (non-tiled) axes, so they are free.
    x_all = x_ref[...].reshape(T * BT, x_ref.shape[-1])
    xproj_ref[...] = (
        jnp.dot(x_all, wih_ref[...], preferred_element_type=jnp.float32)
        + b_ref[...]
    ).reshape(T, BT, 4 * Hp)

    w_hh = whh_ref[...]  # hoist the recurrent weight load out of the loop

    h0 = jnp.zeros((BT, Hp), jnp.float32)
    c0 = jnp.zeros((BT, Hp), jnp.float32)

    def step(t, carry):
        h, c = carry
        # Only the h-dependent matmul remains on the serial critical path.
        gates = xproj_ref[t] + jnp.dot(
            h, w_hh, preferred_element_type=jnp.float32)       # (BT, 4*Hp)
        # PyTorch gate order i, f, g, o; each slice is a full 128-lane vreg.
        i_g = jax.nn.sigmoid(gates[:, 0 * Hp:1 * Hp])
        f_g = jax.nn.sigmoid(gates[:, 1 * Hp:2 * Hp])
        g_g = jnp.tanh(gates[:, 2 * Hp:3 * Hp])
        o_g = jax.nn.sigmoid(gates[:, 3 * Hp:4 * Hp])
        c_new = f_g * c + i_g * g_g
        h_new = o_g * jnp.tanh(c_new)
        return h_new, c_new

    # T is static and small: fully unroll so the scheduler sees across steps.
    h_T, _ = jax.lax.fori_loop(0, T, step, (h0, c0), unroll=True)

    out_ref[...] = (
        jnp.dot(h_T, wout_ref[...], preferred_element_type=jnp.float32)
        + bout_ref[...]
    ).astype(out_ref.dtype)


def _pack_gate_weights(w, hp, k_pad=None):
    """PyTorch gate-stacked (4*H, K) weight -> transposed (K, 4*hp), per-gate
    zero-padded to hp; optionally zero-pad the contraction axis to k_pad."""
    k = w.shape[1]
    w4 = w.reshape(4, N_HIDDEN, k)                          # (4, H, K)
    w4 = jnp.pad(w4, ((0, 0), (0, hp - N_HIDDEN), (0, 0)))  # (4, hp, K)
    wt = jnp.transpose(w4, (2, 0, 1)).reshape(k, 4 * hp)    # (K, 4*hp)
    if k_pad is not None and k_pad > k:
        wt = jnp.pad(wt, ((0, k_pad - k), (0, 0)))
    return wt


def _pack_gate_bias(b, hp):
    b4 = b.reshape(4, N_HIDDEN)
    b4 = jnp.pad(b4, ((0, 0), (0, hp - N_HIDDEN)))
    return b4.reshape(1, 4 * hp)


def lstm_forward(x, params, pred_len):
    """x: (B, T, N_INPUT) batch-first, like the PyTorch module."""
    B, T, _ = x.shape

    # ---- batch tiling ------------------------------------------------------
    B_pad = max(8, _round_up(B, 8))
    bt = min(B_pad, 256)            # batch tile (>= 8 sublanes, <= MXU rows)
    B_pad = _round_up(B_pad, bt)
    n_bt = B_pad // bt

    # ---- layout: time-major inputs, transposed / zero-padded weights --------
    x_tm = jnp.transpose(x, (1, 0, 2)).astype(jnp.float32)          # (T, B, IN)
    x_tm = jnp.pad(x_tm, ((0, 0), (0, B_pad - B), (0, 0)))

    wih_t = _pack_gate_weights(params["w_ih"], H_PAD)               # (IN, 4*Hp)
    whh_t = _pack_gate_weights(params["w_hh"], H_PAD, k_pad=H_PAD)  # (Hp, 4*Hp)
    bias = _pack_gate_bias(params["b_ih"] + params["b_hh"], H_PAD)  # (1, 4*Hp)
    wout_t = jnp.pad(params["w_out"].T,
                     ((0, H_PAD - N_HIDDEN), (0, N_OUT_PAD - N_OUT)))
    bout = jnp.pad(params["b_out"], (0, N_OUT_PAD - N_OUT))[None, :]

    grid_spec = pltpu.PrefetchScalarGridSpec(
        num_scalar_prefetch=0,
        grid=(n_bt,),
        in_specs=[
            pl.BlockSpec((T, bt, N_INPUT), lambda b: (0, b, 0)),
            pl.BlockSpec((N_INPUT, 4 * H_PAD), lambda b: (0, 0)),
            pl.BlockSpec((H_PAD, 4 * H_PAD), lambda b: (0, 0)),
            pl.BlockSpec((1, 4 * H_PAD), lambda b: (0, 0)),
            pl.BlockSpec((H_PAD, N_OUT_PAD), lambda b: (0, 0)),
            pl.BlockSpec((1, N_OUT_PAD), lambda b: (0, 0)),
        ],
        out_specs=pl.BlockSpec((bt, N_OUT_PAD), lambda b: (b, 0)),
        scratch_shapes=[pltpu.VMEM((T, bt, 4 * H_PAD), jnp.float32)],
    )

    y_pad = pl.pallas_call(
        _lstm_kernel,
        out_shape=jax.ShapeDtypeStruct((B_pad, N_OUT_PAD), jnp.float32),
        grid_spec=grid_spec,
        compiler_params=pltpu.CompilerParams(
            dimension_semantics=("parallel",)),
    )(x_tm, wih_t, whh_t, bias, wout_t, bout)

    y_hat = y_pad[:B, :N_OUT]

    # TODO(synk): the reference `y_hat[:, -self.pred_len:, :]` applies three
    # indices to the 2-D (B, 2) tensor produced by linear(h_n[0]) (IndexError
    # in PyTorch as written); we apply the trailing slice along the last
    # existing axis instead, matching the previous implementation.
    return y_hat[:, -pred_len:]


def _lstm_reference(x, params, pred_len):
    """Pure-JAX f32 reference of the PyTorch forward (HIGHEST precision)."""
    B, T, _ = x.shape
    H = N_HIDDEN
    hp = jax.lax.Precision.HIGHEST
    w_ih, w_hh = params["w_ih"], params["w_hh"]
    b = params["b_ih"] + params["b_hh"]
    h = jnp.zeros((B, H), jnp.float32)
    c = jnp.zeros((B, H), jnp.float32)
    for t in range(T):
        gates = (jnp.dot(x[:, t, :], w_ih.T, precision=hp)
                 + jnp.dot(h, w_hh.T, precision=hp) + b)
        i_g = jax.nn.sigmoid(gates[:, 0 * H:1 * H])
        f_g = jax.nn.sigmoid(gates[:, 1 * H:2 * H])
        g_g = jnp.tanh(gates[:, 2 * H:3 * H])
        o_g = jax.nn.sigmoid(gates[:, 3 * H:4 * H])
        c = f_g * c + i_g * g_g
        h = o_g * jnp.tanh(c)
    y = jnp.dot(h, params["w_out"].T, precision=hp) + params["b_out"]
    return y[:, -pred_len:]


def init_params(key):
    """Deterministic synthetic parameters with PyTorch LSTM shapes."""
    ks = jax.random.split(key, 6)
    scale = 1.0 / jnp.sqrt(jnp.float32(N_HIDDEN))
    u = lambda k, shape: jax.random.uniform(
        k, shape, jnp.float32, minval=-scale, maxval=scale)
    return {
        "w_ih": u(ks[0], (4 * N_HIDDEN, N_INPUT)),   # weight_ih_l0
        "w_hh": u(ks[1], (4 * N_HIDDEN, N_HIDDEN)),  # weight_hh_l0
        "b_ih": u(ks[2], (4 * N_HIDDEN,)),           # bias_ih_l0
        "b_hh": u(ks[3], (4 * N_HIDDEN,)),           # bias_hh_l0
        "w_out": u(ks[4], (N_OUT, N_HIDDEN)),        # linear.weight
        "b_out": u(ks[5], (N_OUT,)),                 # linear.bias
    }


if __name__ == "__main__":
    key = jax.random.PRNGKey(0)
    k_x, k_p = jax.random.split(key)

    batch, seq_len, pred_len = 4, 8, 2
    x = jax.random.normal(k_x, (batch, seq_len, N_INPUT), jnp.float32)
    params = init_params(k_p)

    y = lstm_forward(x, params, pred_len)
    jax.block_until_ready(y)

    y_ref = _lstm_reference(x, params, pred_len)
    assert y.shape == (batch, min(pred_len, N_OUT)), y.shape
    assert jnp.allclose(y, y_ref, rtol=1e-4, atol=1e-4), (
        float(jnp.max(jnp.abs(y - y_ref))))
    print("KERNEL_OK")
</pallas_src>

<mosaic_0001>
module attributes {stable_mosaic.version = 11 : i64} {
  func.func @_lstm_kernel(%arg0: i32, %arg1: memref<8x8x2xf32, #tpu.memory_space<vmem>>, %arg2: memref<2x512xf32, #tpu.memory_space<vmem>>, %arg3: memref<128x512xf32, #tpu.memory_space<vmem>>, %arg4: memref<1x512xf32, #tpu.memory_space<vmem>>, %arg5: memref<128x128xf32, #tpu.memory_space<vmem>>, %arg6: memref<1x128xf32, #tpu.memory_space<vmem>>, %arg7: memref<8x128xf32, #tpu.memory_space<vmem>>, %arg8: memref<8x8x512xf32, #tpu.memory_space<vmem>>) attributes {dimension_semantics = [#tpu.dimension_semantics<parallel>], iteration_bounds = array<i64: 1>, scalar_prefetch = 0 : i64, scratch_operands = 1 : i64, tpu.core_type = #tpu.core_type<tc>, window_params = [{transform_indices = @transform_0, window_bounds = array<i64: 8, 8, 2>}, {pipeline_mode = #tpu.pipeline_mode<synchronous>, transform_indices = @transform_1, window_bounds = array<i64: 2, 512>}, {pipeline_mode = #tpu.pipeline_mode<synchronous>, transform_indices = @transform_2, window_bounds = array<i64: 128, 512>}, {pipeline_mode = #tpu.pipeline_mode<synchronous>, transform_indices = @transform_3, window_bounds = array<i64: 1, 512>}, {pipeline_mode = #tpu.pipeline_mode<synchronous>, transform_indices = @transform_4, window_bounds = array<i64: 128, 128>}, {pipeline_mode = #tpu.pipeline_mode<synchronous>, transform_indices = @transform_5, window_bounds = array<i64: 1, 128>}, {transform_indices = @transform_6, window_bounds = array<i64: 8, 128>}]} {
    %c0 = arith.constant 0 : index
    %c0_0 = arith.constant 0 : index
    %c0_1 = arith.constant 0 : index
    %0 = vector.load %arg1[%c0, %c0_0, %c0_1] : memref<8x8x2xf32, #tpu.memory_space<vmem>>, vector<8x8x2xf32>
    %1 = vector.shape_cast %0 : vector<8x8x2xf32> to vector<64x2xf32>
    %c0_2 = arith.constant 0 : index
    %c0_3 = arith.constant 0 : index
    %2 = vector.load %arg2[%c0_2, %c0_3] : memref<2x512xf32, #tpu.memory_space<vmem>>, vector<2x512xf32>
    %cst = arith.constant dense<0.000000e+00> : vector<64x512xf32>
    %3 = tpu.matmul %1, %2, %cst {dimension_numbers = #tpu.dot_dimension_numbers<[1], [0], [0], [1], [0, 0, 1, 1], [], []>} : vector<64x2xf32>, vector<2x512xf32>, vector<64x512xf32> -> vector<64x512xf32>
    %c0_4 = arith.constant 0 : index
    %c0_5 = arith.constant 0 : index
    %4 = vector.load %arg4[%c0_4, %c0_5] : memref<1x512xf32, #tpu.memory_space<vmem>>, vector<1x512xf32>
    %5 = vector.broadcast %4 : vector<1x512xf32> to vector<64x512xf32>
    %6 = arith.addf %3, %5 : vector<64x512xf32>
    %7 = vector.shape_cast %6 : vector<64x512xf32> to vector<8x8x512xf32>
    %c0_6 = arith.constant 0 : index
    %c0_7 = arith.constant 0 : index
    %c0_8 = arith.constant 0 : index
    %8 = vector.load %arg8[%c0_6, %c0_7, %c0_8] : memref<8x8x512xf32, #tpu.memory_space<vmem>>, vector<8x8x512xf32>
    tpu.vector_store %arg8[%c0_6, %c0_7, %c0_8], %7 {strides = array<i32>} : memref<8x8x512xf32, #tpu.memory_space<vmem>>, vector<8x8x512xf32>,
    %c0_9 = arith.constant 0 : index
    %c0_10 = arith.constant 0 : index
    %9 = vector.load %arg3[%c0_9, %c0_10] : memref<128x512xf32, #tpu.memory_space<vmem>>, vector<128x512xf32>
    %cst_11 = arith.constant 0.000000e+00 : f32
    %10 = vector.broadcast %cst_11 : f32 to vector<8x128xf32>
    %cst_12 = arith.constant 0.000000e+00 : f32
    %11 = vector.broadcast %cst_12 : f32 to vector<8x128xf32>
    %c0_i32 = arith.constant 0 : i32
    %12 = arith.index_cast %c0_i32 : i32 to index
    %c0_13 = arith.constant 0 : index
    %c0_14 = arith.constant 0 : index
    %13 = vector.load %arg8[%12, %c0_13, %c0_14] : memref<8x8x512xf32, #tpu.memory_space<vmem>>, vector<1x8x512xf32>
    %14 = vector.shape_cast %13 : vector<1x8x512xf32> to vector<8x512xf32>
    %cst_15 = arith.constant dense<0.000000e+00> : vector<8x512xf32>
    %15 = tpu.matmul %10, %9, %cst_15 {dimension_numbers = #tpu.dot_dimension_numbers<[1], [0], [0], [1], [0, 0, 1, 1], [], []>} : vector<8x128xf32>, vector<128x512xf32>, vector<8x512xf32> -> vector<8x512xf32>
    %16 = arith.addf %14, %15 : vector<8x512xf32>
    %17 = vector.extract_strided_slice %16 {offsets = [0, 0], sizes = [8, 128], strides = [1, 1]} : vector<8x512xf32> to vector<8x128xf32>
    %18 = arith.negf %17 : vector<8x128xf32>
    %19 = math.exp %18 : vector<8x128xf32>
    %cst_16 = arith.constant 1.000000e+00 : f32
    %20 = vector.broadcast %cst_16 : f32 to vector<8x128xf32>
    %21 = arith.addf %20, %19 : vector<8x128xf32>
    %22 = arith.divf %20, %21 : vector<8x128xf32>
    %23 = vector.extract_strided_slice %16 {offsets = [0, 128], sizes = [8, 128], strides = [1, 1]} : vector<8x512xf32> to vector<8x128xf32>
    %24 = arith.negf %23 : vector<8x128xf32>
    %25 = math.exp %24 : vector<8x128xf32>
    %cst_17 = arith.constant 1.000000e+00 : f32
    %26 = vector.broadcast %cst_17 : f32 to vector<8x128xf32>
    %27 = arith.addf %26, %25 : vector<8x128xf32>
    %28 = arith.divf %26, %27 : vector<8x128xf32>
    %29 = vector.extract_strided_slice %16 {offsets = [0, 256], sizes = [8, 128], strides = [1, 1]} : vector<8x512xf32> to vector<8x128xf32>
    %30 = math.tanh %29 : vector<8x128xf32>
    %31 = vector.extract_strided_slice %16 {offsets = [0, 384], sizes = [8, 128], strides = [1, 1]} : vector<8x512xf32> to vector<8x128xf32>
    %32 = arith.negf %31 : vector<8x128xf32>
    %33 = math.exp %32 : vector<8x128xf32>
    %cst_18 = arith.constant 1.000000e+00 : f32
    %34 = vector.broadcast %cst_18 : f32 to vector<8x128xf32>
    %35 = arith.addf %34, %33 : vector<8x128xf32>
    %36 = arith.divf %34, %35 : vector<8x128xf32>
    %37 = arith.mulf %28, %11 : vector<8x128xf32>
    %38 = arith.mulf %22, %30 : vector<8x128xf32>
    %39 = arith.addf %37, %38 : vector<8x128xf32>
    %40 = math.tanh %39 : vector<8x128xf32>
    %41 = arith.mulf %36, %40 : vector<8x128xf32>
    %c1_i32 = arith.constant 1 : i32
    %42 = arith.index_cast %c1_i32 : i32 to index
    %c0_19 = arith.constant 0 : index
    %c0_20 = arith.constant 0 : index
    %43 = vector.load %arg8[%42, %c0_19, %c0_20] : memref<8x8x512xf32, #tpu.memory_space<vmem>>, vector<1x8x512xf32>
    %44 = vector.shape_cast %43 : vector<1x8x512xf32> to vector<8x512xf32>
    %cst_21 = arith.constant dense<0.000000e+00> : vector<8x512xf32>
    %45 = tpu.matmul %41, %9, %cst_21 {dimension_numbers = #tpu.dot_dimension_numbers<[1], [0], [0], [1], [0, 0, 1, 1], [], []>} : vector<8x128xf32>, vector<128x512xf32>, vector<8x512xf32> -> vector<8x512xf32>
    %46 = arith.addf %44, %45 : vector<8x512xf32>
    %47 = vector.extract_strided_slice %46 {offsets = [0, 0], sizes = [8, 128], strides = [1, 1]} : vector<8x512xf32> to vector<8x128xf32>
    %48 = arith.negf %47 : vector<8x128xf32>
    %49 = math.exp %48 : vector<8x128xf32>
    %cst_22 = arith.constant 1.000000e+00 : f32
    %50 = vector.broadcast %cst_22 : f32 to vector<8x128xf32>
    %51 = arith.addf %50, %49 : vector<8x128xf32>
    %52 = arith.divf %50, %51 : vector<8x128xf32>
    %53 = vector.extract_strided_slice %46 {offsets = [0, 128], sizes = [8, 128], strides = [1, 1]} : vector<8x512xf32> to vector<8x128xf32>
    %54 = arith.negf %53 : vector<8x128xf32>
    %55 = math.exp %54 : vector<8x128xf32>
    %cst_23 = arith.constant 1.000000e+00 : f32
    %56 = vector.broadcast %cst_23 : f32 to vector<8x128xf32>
    %57 = arith.addf %56, %55 : vector<8x128xf32>
    %58 = arith.divf %56, %57 : vector<8x128xf32>
    %59 = vector.extract_strided_slice %46 {offsets = [0, 256], sizes = [8, 128], strides = [1, 1]} : vector<8x512xf32> to vector<8x128xf32>
    %60 = math.tanh %59 : vector<8x128xf32>
    %61 = vector.extract_strided_slice %46 {offsets = [0, 384], sizes = [8, 128], strides = [1, 1]} : vector<8x512xf32> to vector<8x128xf32>
    %62 = arith.negf %61 : vector<8x128xf32>
    %63 = math.exp %62 : vector<8x128xf32>
    %cst_24 = arith.constant 1.000000e+00 : f32
    %64 = vector.broadcast %cst_24 : f32 to vector<8x128xf32>
    %65 = arith.addf %64, %63 : vector<8x128xf32>
    %66 = arith.divf %64, %65 : vector<8x128xf32>
    %67 = arith.mulf %58, %39 : vector<8x128xf32>
    %68 = arith.mulf %52, %60 : vector<8x128xf32>
    %69 = arith.addf %67, %68 : vector<8x128xf32>
    %70 = math.tanh %69 : vector<8x128xf32>
    %71 = arith.mulf %66, %70 : vector<8x128xf32>
    %c2_i32 = arith.constant 2 : i32
    %72 = arith.index_cast %c2_i32 : i32 to index
    %c0_25 = arith.constant 0 : index
    %c0_26 = arith.constant 0 : index
    %73 = vector.load %arg8[%72, %c0_25, %c0_26] : memref<8x8x512xf32, #tpu.memory_space<vmem>>, vector<1x8x512xf32>
    %74 = vector.shape_cast %73 : vector<1x8x512xf32> to vector<8x512xf32>
    %cst_27 = arith.constant dense<0.000000e+00> : vector<8x512xf32>
    %75 = tpu.matmul %71, %9, %cst_27 {dimension_numbers = #tpu.dot_dimension_numbers<[1], [0], [0], [1], [0, 0, 1, 1], [], []>} : vector<8x128xf32>, vector<128x512xf32>, vector<8x512xf32> -> vector<8x512xf32>
    %76 = arith.addf %74, %75 : vector<8x512xf32>
    %77 = vector.extract_strided_slice %76 {offsets = [0, 0], sizes = [8, 128], strides = [1, 1]} : vector<8x512xf32> to vector<8x128xf32>
    %78 = arith.negf %77 : vector<8x128xf32>
    %79 = math.exp %78 : vector<8x128xf32>
    %cst_28 = arith.constant 1.000000e+00 : f32
    %80 = vector.broadcast %cst_28 : f32 to vector<8x128xf32>
    %81 = arith.addf %80, %79 : vector<8x128xf32>
    %82 = arith.divf %80, %81 : vector<8x128xf32>
    %83 = vector.extract_strided_slice %76 {offsets = [0, 128], sizes = [8, 128], strides = [1, 1]} : vector<8x512xf32> to vector<8x128xf32>
    %84 = arith.negf %83 : vector<8x128xf32>
    %85 = math.exp %84 : vector<8x128xf32>
    %cst_29 = arith.constant 1.000000e+00 : f32
    %86 = vector.broadcast %cst_29 : f32 to vector<8x128xf32>
    %87 = arith.addf %86, %85 : vector<8x128xf32>
    %88 = arith.divf %86, %87 : vector<8x128xf32>
    %89 = vector.extract_strided_slice %76 {offsets = [0, 256], sizes = [8, 128], strides = [1, 1]} : vector<8x512xf32> to vector<8x128xf32>
    %90 = math.tanh %89 : vector<8x128xf32>
    %91 = vector.extract_strided_slice %76 {offsets = [0, 384], sizes = [8, 128], strides = [1, 1]} : vector<8x512xf32> to vector<8x128xf32>
    %92 = arith.negf %91 : vector<8x128xf32>
    %93 = math.exp %92 : vector<8x128xf32>
    %cst_30 = arith.constant 1.000000e+00 : f32
    %94 = vector.broadcast %cst_30 : f32 to vector<8x128xf32>
    %95 = arith.addf %94, %93 : vector<8x128xf32>
    %96 = arith.divf %94, %95 : vector<8x128xf32>
    %97 = arith.mulf %88, %69 : vector<8x128xf32>
    %98 = arith.mulf %82, %90 : vector<8x128xf32>
    %99 = arith.addf %97, %98 : vector<8x128xf32>
    %100 = math.tanh %99 : vector<8x128xf32>
    %101 = arith.mulf %96, %100 : vector<8x128xf32>
    %c3_i32 = arith.constant 3 : i32
    %102 = arith.index_cast %c3_i32 : i32 to index
    %c0_31 = arith.constant 0 : index
    %c0_32 = arith.constant 0 : index
    %103 = vector.load %arg8[%102, %c0_31, %c0_32] : memref<8x8x512xf32, #tpu.memory_space<vmem>>, vector<1x8x512xf32>
    %104 = vector.shape_cast %103 : vector<1x8x512xf32> to vector<8x512xf32>
    %cst_33 = arith.constant dense<0.000000e+00> : vector<8x512xf32>
    %105 = tpu.matmul %101, %9, %cst_33 {dimension_numbers = #tpu.dot_dimension_numbers<[1], [0], [0], [1], [0, 0, 1, 1], [], []>} : vector<8x128xf32>, vector<128x512xf32>, vector<8x512xf32> -> vector<8x512xf32>
    %106 = arith.addf %104, %105 : vector<8x512xf32>
    %107 = vector.extract_strided_slice %106 {offsets = [0, 0], sizes = [8, 128], strides = [1, 1]} : vector<8x512xf32> to vector<8x128xf32>
    %108 = arith.negf %107 : vector<8x128xf32>
    %109 = math.exp %108 : vector<8x128xf32>
    %cst_34 = arith.constant 1.000000e+00 : f32
    %110 = vector.broadcast %cst_34 : f32 to vector<8x128xf32>
    %111 = arith.addf %110, %109 : vector<8x128xf32>
    %112 = arith.divf %110, %111 : vector<8x128xf32>
    %113 = vector.extract_strided_slice %106 {offsets = [0, 128], sizes = [8, 128], strides = [1, 1]} : vector<8x512xf32> to vector<8x128xf32>
    %114 = arith.negf %113 : vector<8x128xf32>
    %115 = math.exp %114 : vector<8x128xf32>
    %cst_35 = arith.constant 1.000000e+00 : f32
    %116 = vector.broadcast %cst_35 : f32 to vector<8x128xf32>
    %117 = arith.addf %116, %115 : vector<8x128xf32>
    %118 = arith.divf %116, %117 : vector<8x128xf32>
    %119 = vector.extract_strided_slice %106 {offsets = [0, 256], sizes = [8, 128], strides = [1, 1]} : vector<8x512xf32> to vector<8x128xf32>
    %120 = math.tanh %119 : vector<8x128xf32>
    %121 = vector.extract_strided_slice %106 {offsets = [0, 384], sizes = [8, 128], strides = [1, 1]} : vector<8x512xf32> to vector<8x128xf32>
    %122 = arith.negf %121 : vector<8x128xf32>
    %123 = math.exp %122 : vector<8x128xf32>
    %cst_36 = arith.constant 1.000000e+00 : f32
    %124 = vector.broadcast %cst_36 : f32 to vector<8x128xf32>
    %125 = arith.addf %124, %123 : vector<8x128xf32>
    %126 = arith.divf %124, %125 : vector<8x128xf32>
    %127 = arith.mulf %118, %99 : vector<8x128xf32>
    %128 = arith.mulf %112, %120 : vector<8x128xf32>
    %129 = arith.addf %127, %128 : vector<8x128xf32>
    %130 = math.tanh %129 : vector<8x128xf32>
    %131 = arith.mulf %126, %130 : vector<8x128xf32>
    %c4_i32 = arith.constant 4 : i32
    %132 = arith.index_cast %c4_i32 : i32 to index
    %c0_37 = arith.constant 0 : index
    %c0_38 = arith.constant 0 : index
    %133 = vector.load %arg8[%132, %c0_37, %c0_38] : memref<8x8x512xf32, #tpu.memory_space<vmem>>, vector<1x8x512xf32>
    %134 = vector.shape_cast %133 : vector<1x8x512xf32> to vector<8x512xf32>
    %cst_39 = arith.constant dense<0.000000e+00> : vector<8x512xf32>
    %135 = tpu.matmul %131, %9, %cst_39 {dimension_numbers = #tpu.dot_dimension_numbers<[1], [0], [0], [1], [0, 0, 1, 1], [], []>} : vector<8x128xf32>, vector<128x512xf32>, vector<8x512xf32> -> vector<8x512xf32>
    %136 = arith.addf %134, %135 : vector<8x512xf32>
    %137 = vector.extract_strided_slice %136 {offsets = [0, 0], sizes = [8, 128], strides = [1, 1]} : vector<8x512xf32> to vector<8x128xf32>
    %138 = arith.negf %137 : vector<8x128xf32>
    %139 = math.exp %138 : vector<8x128xf32>
    %cst_40 = arith.constant 1.000000e+00 : f32
    %140 = vector.broadcast %cst_40 : f32 to vector<8x128xf32>
    %141 = arith.addf %140, %139 : vector<8x128xf32>
    %142 = arith.divf %140, %141 : vector<8x128xf32>
    %143 = vector.extract_strided_slice %136 {offsets = [0, 128], sizes = [8, 128], strides = [1, 1]} : vector<8x512xf32> to vector<8x128xf32>
    %144 = arith.negf %143 : vector<8x128xf32>
    %145 = math.exp %144 : vector<8x128xf32>
    %cst_41 = arith.constant 1.000000e+00 : f32
    %146 = vector.broadcast %cst_41 : f32 to vector<8x128xf32>
    %147 = arith.addf %146, %145 : vector<8x128xf32>
    %148 = arith.divf %146, %147 : vector<8x128xf32>
    %149 = vector.extract_strided_slice %136 {offsets = [0, 256], sizes = [8, 128], strides = [1, 1]} : vector<8x512xf32> to vector<8x128xf32>
    %150 = math.tanh %149 : vector<8x128xf32>
    %151 = vector.extract_strided_slice %136 {offsets = [0, 384], sizes = [8, 128], strides = [1, 1]} : vector<8x512xf32> to vector<8x128xf32>
    %152 = arith.negf %151 : vector<8x128xf32>
    %153 = math.exp %152 : vector<8x128xf32>
    %cst_42 = arith.constant 1.000000e+00 : f32
    %154 = vector.broadcast %cst_42 : f32 to vector<8x128xf32>
    %155 = arith.addf %154, %153 : vector<8x128xf32>
    %156 = arith.divf %154, %155 : vector<8x128xf32>
    %157 = arith.mulf %148, %129 : vector<8x128xf32>
    %158 = arith.mulf %142, %150 : vector<8x128xf32>
    %159 = arith.addf %157, %158 : vector<8x128xf32>
    %160 = math.tanh %159 : vector<8x128xf32>
    %161 = arith.mulf %156, %160 : vector<8x128xf32>
    %c5_i32 = arith.constant 5 : i32
    %162 = arith.index_cast %c5_i32 : i32 to index
    %c0_43 = arith.constant 0 : index
    %c0_44 = arith.constant 0 : index
    %163 = vector.load %arg8[%162, %c0_43, %c0_44] : memref<8x8x512xf32, #tpu.memory_space<vmem>>, vector<1x8x512xf32>
    %164 = vector.shape_cast %163 : vector<1x8x512xf32> to vector<8x512xf32>
    %cst_45 = arith.constant dense<0.000000e+00> : vector<8x512xf32>
    %165 = tpu.matmul %161, %9, %cst_45 {dimension_numbers = #tpu.dot_dimension_numbers<[1], [0], [0], [1], [0, 0, 1, 1], [], []>} : vector<8x128xf32>, vector<128x512xf32>, vector<8x512xf32> -> vector<8x512xf32>
    %166 = arith.addf %164, %165 : vector<8x512xf32>
    %167 = vector.extract_strided_slice %166 {offsets = [0, 0], sizes = [8, 128], strides = [1, 1]} : vector<8x512xf32> to vector<8x128xf32>
    %168 = arith.negf %167 : vector<8x128xf32>
    %169 = math.exp %168 : vector<8x128xf32>
    %cst_46 = arith.constant 1.000000e+00 : f32
    %170 = vector.broadcast %cst_46 : f32 to vector<8x128xf32>
    %171 = arith.addf %170, %169 : vector<8x128xf32>
    %172 = arith.divf %170, %171 : vector<8x128xf32>
    %173 = vector.extract_strided_slice %166 {offsets = [0, 128], sizes = [8, 128], strides = [1, 1]} : vector<8x512xf32> to vector<8x128xf32>
    %174 = arith.negf %173 : vector<8x128xf32>
    %175 = math.exp %174 : vector<8x128xf32>
    %cst_47 = arith.constant 1.000000e+00 : f32
    %176 = vector.broadcast %cst_47 : f32 to vector<8x128xf32>
    %177 = arith.addf %176, %175 : vector<8x128xf32>
    %178 = arith.divf %176, %177 : vector<8x128xf32>
    %179 = vector.extract_strided_slice %166 {offsets = [0, 256], sizes = [8, 128], strides = [1, 1]} : vector<8x512xf32> to vector<8x128xf32>
    %180 = math.tanh %179 : vector<8x128xf32>
    %181 = vector.extract_strided_slice %166 {offsets = [0, 384], sizes = [8, 128], strides = [1, 1]} : vector<8x512xf32> to vector<8x128xf32>
    %182 = arith.negf %181 : vector<8x128xf32>
    %183 = math.exp %182 : vector<8x128xf32>
    %cst_48 = arith.constant 1.000000e+00 : f32
    %184 = vector.broadcast %cst_48 : f32 to vector<8x128xf32>
    %185 = arith.addf %184, %183 : vector<8x128xf32>
    %186 = arith.divf %184, %185 : vector<8x128xf32>
    %187 = arith.mulf %178, %159 : vector<8x128xf32>
    %188 = arith.mulf %172, %180 : vector<8x128xf32>
    %189 = arith.addf %187, %188 : vector<8x128xf32>
    %190 = math.tanh %189 : vector<8x128xf32>
    %191 = arith.mulf %186, %190 : vector<8x128xf32>
    %c6_i32 = arith.constant 6 : i32
    %192 = arith.index_cast %c6_i32 : i32 to index
    %c0_49 = arith.constant 0 : index
    %c0_50 = arith.constant 0 : index
    %193 = vector.load %arg8[%192, %c0_49, %c0_50] : memref<8x8x512xf32, #tpu.memory_space<vmem>>, vector<1x8x512xf32>
    %194 = vector.shape_cast %193 : vector<1x8x512xf32> to vector<8x512xf32>
    %cst_51 = arith.constant dense<0.000000e+00> : vector<8x512xf32>
    %195 = tpu.matmul %191, %9, %cst_51 {dimension_numbers = #tpu.dot_dimension_numbers<[1], [0], [0], [1], [0, 0, 1, 1], [], []>} : vector<8x128xf32>, vector<128x512xf32>, vector<8x512xf32> -> vector<8x512xf32>
    %196 = arith.addf %194, %195 : vector<8x512xf32>
    %197 = vector.extract_strided_slice %196 {offsets = [0, 0], sizes = [8, 128], strides = [1, 1]} : vector<8x512xf32> to vector<8x128xf32>
    %198 = arith.negf %197 : vector<8x128xf32>
    %199 = math.exp %198 : vector<8x128xf32>
    %cst_52 = arith.constant 1.000000e+00 : f32
    %200 = vector.broadcast %cst_52 : f32 to vector<8x128xf32>
    %201 = arith.addf %200, %199 : vector<8x128xf32>
    %202 = arith.divf %200, %201 : vector<8x128xf32>
    %203 = vector.extract_strided_slice %196 {offsets = [0, 128], sizes = [8, 128], strides = [1, 1]} : vector<8x512xf32> to vector<8x128xf32>
    %204 = arith.negf %203 : vector<8x128xf32>
    %205 = math.exp %204 : vector<8x128xf32>
    %cst_53 = arith.constant 1.000000e+00 : f32
    %206 = vector.broadcast %cst_53 : f32 to vector<8x128xf32>
    %207 = arith.addf %206, %205 : vector<8x128xf32>
    %208 = arith.divf %206, %207 : vector<8x128xf32>
    %209 = vector.extract_strided_slice %196 {offsets = [0, 256], sizes = [8, 128], strides = [1, 1]} : vector<8x512xf32> to vector<8x128xf32>
    %210 = math.tanh %209 : vector<8x128xf32>
    %211 = vector.extract_strided_slice %196 {offsets = [0, 384], sizes = [8, 128], strides = [1, 1]} : vector<8x512xf32> to vector<8x128xf32>
    %212 = arith.negf %211 : vector<8x128xf32>
    %213 = math.exp %212 : vector<8x128xf32>
    %cst_54 = arith.constant 1.000000e+00 : f32
    %214 = vector.broadcast %cst_54 : f32 to vector<8x128xf32>
    %215 = arith.addf %214, %213 : vector<8x128xf32>
    %216 = arith.divf %214, %215 : vector<8x128xf32>
    %217 = arith.mulf %208, %189 : vector<8x128xf32>
    %218 = arith.mulf %202, %210 : vector<8x128xf32>
    %219 = arith.addf %217, %218 : vector<8x128xf32>
    %220 = math.tanh %219 : vector<8x128xf32>
    %221 = arith.mulf %216, %220 : vector<8x128xf32>
    %c7_i32 = arith.constant 7 : i32
    %222 = arith.index_cast %c7_i32 : i32 to index
    %c0_55 = arith.constant 0 : index
    %c0_56 = arith.constant 0 : index
    %223 = vector.load %arg8[%222, %c0_55, %c0_56] : memref<8x8x512xf32, #tpu.memory_space<vmem>>, vector<1x8x512xf32>
    %224 = vector.shape_cast %223 : vector<1x8x512xf32> to vector<8x512xf32>
    %cst_57 = arith.constant dense<0.000000e+00> : vector<8x512xf32>
    %225 = tpu.matmul %221, %9, %cst_57 {dimension_numbers = #tpu.dot_dimension_numbers<[1], [0], [0], [1], [0, 0, 1, 1], [], []>} : vector<8x128xf32>, vector<128x512xf32>, vector<8x512xf32> -> vector<8x512xf32>
    %226 = arith.addf %224, %225 : vector<8x512xf32>
    %227 = vector.extract_strided_slice %226 {offsets = [0, 0], sizes = [8, 128], strides = [1, 1]} : vector<8x512xf32> to vector<8x128xf32>
    %228 = arith.negf %227 : vector<8x128xf32>
    %229 = math.exp %228 : vector<8x128xf32>
    %cst_58 = arith.constant 1.000000e+00 : f32
    %230 = vector.broadcast %cst_58 : f32 to vector<8x128xf32>
    %231 = arith.addf %230, %229 : vector<8x128xf32>
    %232 = arith.divf %230, %231 : vector<8x128xf32>
    %233 = vector.extract_strided_slice %226 {offsets = [0, 128], sizes = [8, 128], strides = [1, 1]} : vector<8x512xf32> to vector<8x128xf32>
    %234 = arith.negf %233 : vector<8x128xf32>
    %235 = math.exp %234 : vector<8x128xf32>
    %cst_59 = arith.constant 1.000000e+00 : f32
    %236 = vector.broadcast %cst_59 : f32 to vector<8x128xf32>
    %237 = arith.addf %236, %235 : vector<8x128xf32>
    %238 = arith.divf %236, %237 : vector<8x128xf32>
    %239 = vector.extract_strided_slice %226 {offsets = [0, 256], sizes = [8, 128], strides = [1, 1]} : vector<8x512xf32> to vector<8x128xf32>
    %240 = math.tanh %239 : vector<8x128xf32>
    %241 = vector.extract_strided_slice %226 {offsets = [0, 384], sizes = [8, 128], strides = [1, 1]} : vector<8x512xf32> to vector<8x128xf32>
    %242 = arith.negf %241 : vector<8x128xf32>
    %243 = math.exp %242 : vector<8x128xf32>
    %cst_60 = arith.constant 1.000000e+00 : f32
    %244 = vector.broadcast %cst_60 : f32 to vector<8x128xf32>
    %245 = arith.addf %244, %243 : vector<8x128xf32>
    %246 = arith.divf %244, %245 : vector<8x128xf32>
    %247 = arith.mulf %238, %219 : vector<8x128xf32>
    %248 = arith.mulf %232, %240 : vector<8x128xf32>
    %249 = arith.addf %247, %248 : vector<8x128xf32>
    %250 = math.tanh %249 : vector<8x128xf32>
    %251 = arith.mulf %246, %250 : vector<8x128xf32>
    %c8_i32 = arith.constant 8 : i32
    %c0_61 = arith.constant 0 : index
    %c0_62 = arith.constant 0 : index
    %252 = vector.load %arg5[%c0_61, %c0_62] : memref<128x128xf32, #tpu.memory_space<vmem>>, vector<128x128xf32>
    %cst_63 = arith.constant dense<0.000000e+00> : vector<8x128xf32>
    %253 = tpu.matmul %251, %252, %cst_63 {dimension_numbers = #tpu.dot_dimension_numbers<[1], [0], [0], [1], [0, 0, 1, 1], [], []>} : vector<8x128xf32>, vector<128x128xf32>, vector<8x128xf32> -> vector<8x128xf32>
    %c0_64 = arith.constant 0 : index
    %c0_65 = arith.constant 0 : index
    %254 = vector.load %arg6[%c0_64, %c0_65] : memref<1x128xf32, #tpu.memory_space<vmem>>, vector<1x128xf32>
    %255 = vector.broadcast %254 : vector<1x128xf32> to vector<8x128xf32>
    %256 = arith.addf %253, %255 : vector<8x128xf32>
    %c0_66 = arith.constant 0 : index
    %c0_67 = arith.constant 0 : index
    %257 = vector.load %arg7[%c0_66, %c0_67] : memref<8x128xf32, #tpu.memory_space<vmem>>, vector<8x128xf32>
    tpu.vector_store %arg7[%c0_66, %c0_67], %256 {strides = array<i32>} : memref<8x128xf32, #tpu.memory_space<vmem>>, vector<8x128xf32>,
    return
  }
  func.func @transform_0(%arg0: i32) -> (i32, i32, i32) {
    %c0_i32 = arith.constant 0 : i32
    %c0_i32_0 = arith.constant 0 : i32
    %c0_i32_1 = arith.constant 0 : i32
    return %c0_i32, %arg0, %c0_i32_0 : i32, i32, i32
  }
  func.func @transform_1(%arg0: i32) -> (i32, i32) {
    %c0_i32 = arith.constant 0 : i32
    %c0_i32_0 = arith.constant 0 : i32
    %c0_i32_1 = arith.constant 0 : i32
    return %c0_i32, %c0_i32_0 : i32, i32
  }
  func.func @transform_2(%arg0: i32) -> (i32, i32) {
    %c0_i32 = arith.constant 0 : i32
    %c0_i32_0 = arith.constant 0 : i32
    %c0_i32_1 = arith.constant 0 : i32
    return %c0_i32, %c0_i32_0 : i32, i32
  }
  func.func @transform_3(%arg0: i32) -> (i32, i32) {
    %c0_i32 = arith.constant 0 : i32
    %c0_i32_0 = arith.constant 0 : i32
    %c0_i32_1 = arith.constant 0 : i32
    return %c0_i32, %c0_i32_0 : i32, i32
  }
  func.func @transform_4(%arg0: i32) -> (i32, i32) {
    %c0_i32 = arith.constant 0 : i32
    %c0_i32_0 = arith.constant 0 : i32
    %c0_i32_1 = arith.constant 0 : i32
    return %c0_i32, %c0_i32_0 : i32, i32
  }
  func.func @transform_5(%arg0: i32) -> (i32, i32) {
    %c0_i32 = arith.constant 0 : i32
    %c0_i32_0 = arith.constant 0 : i32
    %c0_i32_1 = arith.constant 0 : i32
    return %c0_i32, %c0_i32_0 : i32, i32
  }
  func.func @transform_6(%arg0: i32) -> (i32, i32) {
    %c0_i32 = arith.constant 0 : i32
    %c0_i32_0 = arith.constant 0 : i32
    return %arg0, %c0_i32 : i32, i32
  }
}

</mosaic_0001>

<llo_original>
// kernel: tpu_custom_call.1
$region0: #{tpu_custom_call.1}
  #allocation0 [shape = 'u32[]', space=smem, size = 0x4, offset = 0x4, fixed_abs, tag = 'smem constant byte address 0x4 - core index']
  #allocation1 [shape = 'u32[144,128]{1,0:T(1,128)}', space=vmem, size = 0x12000, scoped, tag = 'internal scratch']
  #allocation2 [shape = 'f32[8,8,512]{2,1,0:T(8,128)}', space=vmem, size = 0x20000, scoped, tag = 'scratch operand']
  %s0 = inlined_call_operand.vmem [shape: f32[8,8,2], index: 0, kind: input, shape index: {}]
  %s1 = inlined_call_operand.vmem [shape: f32[2,512], index: 1, kind: input, shape index: {}]
  %s2 = inlined_call_operand.hbm [shape: f32[128,512], index: 2, kind: input, shape index: {}]
  %s3 = inlined_call_operand.vmem [shape: f32[1,512], index: 3, kind: input, shape index: {}]
  %s4 = inlined_call_operand.hbm [shape: f32[128,128], index: 4, kind: input, shape index: {}]
  %s5 = inlined_call_operand.vmem [shape: f32[1,128], index: 5, kind: input, shape index: {}]
  %s6 = inlined_call_operand.hbm [shape: f32[8,128], index: 6, kind: output, shape index: {}]
  %s7 = sld [smem:[#allocation0]]
  $region42: #{tpu_custom_call.1} parent=0
    _
  %s9 = ssub.s32 1, %s7
  %s10 = scalar_select 0, %s9, %s7
  $region1: #{tpu_custom_call.1} parent=0
    #allocation3 [shape = 'u8[262144]{0}', space=vmem, size = 0x40000, scoped, tag = 'input window, operand 2, single buffered']
    #allocation4 [shape = 's32[1]{0}', space=sflag, size = 0x4, scoped, tag = 'scoped memory for tpu_custom_call.1']
    #allocation5 [shape = 's32[1]{0}', space=sflag, size = 0x4, scoped, tag = 'scoped memory for tpu_custom_call.1']
    #allocation6 [shape = 'u8[65536]{0}', space=vmem, size = 0x10000, scoped, tag = 'input window, operand 4, single buffered']
    #allocation7 [shape = 's32[1]{0}', space=sflag, size = 0x4, scoped, tag = 'scoped memory for tpu_custom_call.1']
    #allocation8 [shape = 'u8[4096]{0}', space=vmem, size = 0x1000, scoped, tag = 'output window, operand 0, single buffered']
    %11 = vsyncpa [#allocation4], 0
    %12 = vsyncpa [#allocation7], 0
    %13 = vsyncpa [#allocation5], 0
    // Predicated region
    $region2: #{tpu_custom_call.1} parent=1 // pred_check
      _
    $region3: #{tpu_custom_call.1} parent=1 // pred_check_branch
      %15 = sbr.rel (0) target = $region5
    $region4: #{tpu_custom_call.1} parent=1 // pred_region
      _
    $region5: #{tpu_custom_call.1} parent=1 // pred_fallthru
      _
    // Predicated region
    $region6: #{tpu_custom_call.1} parent=1 // pred_check
      _
    $region7: #{tpu_custom_call.1} parent=1 // pred_check_branch
      %17 = sbr.rel (0) target = $region9
    $region8: #{tpu_custom_call.1} parent=1 // pred_region
      _
    $region9: #{tpu_custom_call.1} parent=1 // pred_fallthru
      _
    // Predicated region
    $region10: #{tpu_custom_call.1} parent=1 // pred_check
      _
    $region11: #{tpu_custom_call.1} parent=1 // pred_check_branch
      %19 = sbr.rel (0) target = $region13
    $region12: #{tpu_custom_call.1} parent=1 // pred_region
      %s21 = ssub.s32 8192, 8192
      %22 = vsyncadd [#allocation4], %s21
      %s23 = sshll.u32 [#allocation3], 4
      %s24 = int_to_ptr.vmem [resolvable:$true] %s23
      %29 = dma.hbm_to_vmem [thread:$0]  %s2, 8192, %s24, [#allocation4], 512, 512, 32
    $region13: #{tpu_custom_call.1} parent=1 // pred_fallthru
      _
    // Predicated region
    $region14: #{tpu_custom_call.1} parent=1 // pred_check
      _
    $region15: #{tpu_custom_call.1} parent=1 // pred_check_branch
      %31 = sbr.rel (0) target = $region17
    $region16: #{tpu_custom_call.1} parent=1 // pred_region
      _
    $region17: #{tpu_custom_call.1} parent=1 // pred_fallthru
      _
    // Predicated region
    $region18: #{tpu_custom_call.1} parent=1 // pred_check
      _
    $region19: #{tpu_custom_call.1} parent=1 // pred_check_branch
      %33 = sbr.rel (0) target = $region21
    $region20: #{tpu_custom_call.1} parent=1 // pred_region
      %s35 = ssub.s32 2048, 2048
      %36 = vsyncadd [#allocation7], %s35
      %s37 = sshll.u32 [#allocation6], 4
      %s38 = int_to_ptr.vmem [resolvable:$true] %s37
      %43 = dma.hbm_to_vmem [thread:$0]  %s4, 2048, %s38, [#allocation7], 128, 128, 8
    $region21: #{tpu_custom_call.1} parent=1 // pred_fallthru
      _
    // Predicated region
    $region22: #{tpu_custom_call.1} parent=1 // pred_check
      _
    $region23: #{tpu_custom_call.1} parent=1 // pred_check_branch
      %45 = sbr.rel (0) target = $region25
    $region24: #{tpu_custom_call.1} parent=1 // pred_region
      _
    $region25: #{tpu_custom_call.1} parent=1 // pred_fallthru
      _
    // Predicated region
    $region26: #{tpu_custom_call.1} parent=1 // pred_check
      _
    $region27: #{tpu_custom_call.1} parent=1 // pred_check_branch
      %47 = sbr.rel (0) target = $region29
    $region28: #{tpu_custom_call.1} parent=1 // pred_region
      %48 = dma.done [#allocation4], 8192
    $region29: #{tpu_custom_call.1} parent=1 // pred_fallthru
      _
    // Predicated region
    $region30: #{tpu_custom_call.1} parent=1 // pred_check
      _
    $region31: #{tpu_custom_call.1} parent=1 // pred_check_branch
      %50 = sbr.rel (0) target = $region33
    $region32: #{tpu_custom_call.1} parent=1 // pred_region
      %51 = dma.done [#allocation7], 2048
    $region33: #{tpu_custom_call.1} parent=1 // pred_fallthru
      _
    %v52 = vld [vmem:[%s0] sm:$0xff]
    %v53 = vld [vmem:[%s0 + $0x8] sm:$0xff]
    %v54 = vld [vmem:[%s0 + $0x10] sm:$0xff]
    %v55 = vld [vmem:[%s0 + $0x18] sm:$0xff]
    %v56 = vld [vmem:[%s0 + $0x20] sm:$0xff]
    %v57 = vld [vmem:[%s0 + $0x28] sm:$0xff]
    %v58 = vld [vmem:[%s0 + $0x30] sm:$0xff]
    %v59 = vld [vmem:[%s0 + $0x38] sm:$0xff]
    %v60 = vld [vmem:[%s1] sm:$0xff]
    %v61 = vld [vmem:[%s3] sm:$0xf]
    %v63 = vlaneseq
    %v64 = vshrl.u32 %v63, 7
    %v65 = vsub.s32 0, %v64
    %v66 = vrot.slane %v61, %v65
    %v67 = vlaneseq
    %v68 = vshrl.u32 %v67, 7
    %v69 = vsub.s32 1, %v68
    %v70 = vrot.slane %v61, %v69
    %v71 = vlaneseq
    %v72 = vshrl.u32 %v71, 7
    %v73 = vsub.s32 2, %v72
    %v74 = vrot.slane %v61, %v73
    %v75 = vlaneseq
    %v76 = vshrl.u32 %v75, 7
    %v77 = vsub.s32 3, %v76
    %v78 = vrot.slane %v61, %v77
    %v84 = vcombine.high %v60, %v60
    %v86 = vunpack.c.l.s4 1983009808
    %v87 = vunpack.c.0.s8 %v86
    %v88 = vlaneseq
    %v89 = vshrl.u32 %v88, 7
    %v90 = vsub.s32 %v87, %v89
    %v91 = vrot.slane %v60, %v90
    %v93 = vunpack.c.l.s4 1983009808
    %v94 = vunpack.c.0.s8 %v93
    %v95 = vlaneseq
    %v96 = vshrl.u32 %v95, 7
    %v97 = vsub.s32 %v94, %v96
    %v98 = vrot.slane %v84, %v97
    %v99 = vcombine.high %v91, %v91
    %v100 = vcombine.high %v98, %v98
    %vm101 = vcmask 15360
    %v103 = vsel %vm101, %v52, 0
    %v106 = vsel %vm101, %v53, 0
    %v109 = vsel %vm101, %v54, 0
    %v112 = vsel %vm101, %v55, 0
    %v115 = vsel %vm101, %v56, 0
    %v118 = vsel %vm101, %v57, 0
    %v121 = vsel %vm101, %v58, 0
    %v124 = vsel %vm101, %v59, 0
    %vm126 = vcmask 1041408
    %v127 = vsel %vm126, %v91, 0
    %v129 = vsel %vm126, %v99, 0
    %v131 = vsel %vm126, %v98, 0
    %v133 = vsel %vm126, %v100, 0
    %135 = vmatprep.subr.mxu0 %v129
    %136 = vmatpush1.msra.mxu0 %v127
    %137 = vmatprep.subr.mxu0 0.0
    %138 = vmatpush1.msra.mxu0 0.0
    %139 = vmatprep.subr.mxu0 0.0
    %140 = vmatpush1.msra.mxu0 0.0
    %141 = vmatprep.subr.mxu0 0.0
    %142 = vmatpush1.msra.mxu0 0.0
    %143 = vmatprep.subr.mxu0 0.0
    %144 = vmatpush1.msra.mxu0 0.0
    %145 = vmatprep.subr.mxu0 0.0
    %146 = vmatpush1.msra.mxu0 0.0
    %147 = vmatprep.subr.mxu0 0.0
    %148 = vmatpush1.msra.mxu0 0.0
    %149 = vmatprep.subr.mxu0 0.0
    %150 = vmatpush1.msra.mxu0 0.0
    %151 = vmatprep.subr.mxu0 0.0
    %152 = vmatpush1.msra.mxu0 0.0
    %153 = vmatprep.subr.mxu0 0.0
    %154 = vmatpush1.msra.mxu0 0.0
    %155 = vmatprep.subr.mxu0 0.0
    %156 = vmatpush1.msra.mxu0 0.0
    %157 = vmatprep.subr.mxu0 0.0
    %158 = vmatpush1.msra.mxu0 0.0
    %159 = vmatprep.subr.mxu0 0.0
    %160 = vmatpush1.msra.mxu0 0.0
    %161 = vmatprep.subr.mxu0 0.0
    %162 = vmatpush1.msra.mxu0 0.0
    %163 = vmatprep.subr.mxu0 0.0
    %164 = vmatpush1.msra.mxu0 0.0
    %165 = vmatprep.subr.mxu0 0.0
    %166 = vmatpush1.msra.mxu0 0.0
    %167 = vmatprep.subr.mxu0 0.0
    %168 = vmatpush1.msra.mxu0 0.0
    %169 = vmatprep.subr.mxu0 0.0
    %170 = vmatpush1.msra.mxu0 0.0
    %171 = vmatprep.subr.mxu0 0.0
    %172 = vmatpush1.msra.mxu0 0.0
    %173 = vmatprep.subr.mxu0 0.0
    %174 = vmatpush1.msra.mxu0 0.0
    %175 = vmatprep.subr.mxu0 0.0
    %176 = vmatpush1.msra.mxu0 0.0
    %177 = vmatprep.subr.mxu0 0.0
    %178 = vmatpush1.msra.mxu0 0.0
    %179 = vmatprep.subr.mxu0 0.0
    %180 = vmatpush1.msra.mxu0 0.0
    %181 = vmatprep.subr.mxu0 0.0
    %182 = vmatpush1.msra.mxu0 0.0
    %183 = vmatprep.subr.mxu0 0.0
    %184 = vmatpush1.msra.mxu0 0.0
    %185 = vmatprep.subr.mxu0 0.0
    %186 = vmatpush1.msra.mxu0 0.0
    %187 = vmatprep.subr.mxu0 0.0
    %188 = vmatpush1.msra.mxu0 0.0
    %189 = vmatprep.subr.mxu0 0.0
    %190 = vmatpush1.msra.mxu0 0.0
    %191 = vmatprep.subr.mxu0 0.0
    %192 = vmatpush1.msra.mxu0 0.0
    %193 = vmatprep.subr.mxu0 0.0
    %194 = vmatpush1.msra.mxu0 0.0
    %195 = vmatprep.subr.mxu0 0.0
    %196 = vmatpush1.msra.mxu0 0.0
    %197 = vmatprep.subr.mxu0 0.0
    %198 = vmatpush1.msra.mxu0 0.0
    %199 = vmatprep.mubr.f32.mxu0 0.0
    %200 = vmatmul.mubr.f32.gmra.mrb[0].mxu0 %v103
    %v201 = vpop.f32.mrb[0].mxu0
    %v202 = vadd.f32 %v66, %v201
    %v203 = vpop.f32.mrb[0].mxu0
    %v204 = vadd.f32 %v70, %v203
    %205 = vmatprep.mubr.f32.mxu0 0.0
    %206 = vmatmul.mubr.f32.gmra.mrb[0].mxu0 %v106
    %v207 = vpop.f32.mrb[0].mxu0
    %v208 = vadd.f32 %v66, %v207
    %v209 = vpop.f32.mrb[0].mxu0
    %v210 = vadd.f32 %v70, %v209
    %211 = vmatprep.mubr.f32.mxu0 0.0
    %212 = vmatmul.mubr.f32.gmra.mrb[0].mxu0 %v109
    %v213 = vpop.f32.mrb[0].mxu0
    %v214 = vadd.f32 %v66, %v213
    %v215 = vpop.f32.mrb[0].mxu0
    %v216 = vadd.f32 %v70, %v215
    %217 = vmatprep.mubr.f32.mxu0 0.0
    %218 = vmatmul.mubr.f32.gmra.mrb[0].mxu0 %v112
    %v219 = vpop.f32.mrb[0].mxu0
    %v220 = vadd.f32 %v66, %v219
    %v221 = vpop.f32.mrb[0].mxu0
    %v222 = vadd.f32 %v70, %v221
    %223 = vmatprep.mubr.f32.mxu0 0.0
    %224 = vmatmul.mubr.f32.gmra.mrb[0].mxu0 %v115
    %v225 = vpop.f32.mrb[0].mxu0
    %v226 = vadd.f32 %v66, %v225
    %v227 = vpop.f32.mrb[0].mxu0
    %v228 = vadd.f32 %v70, %v227
    %229 = vmatprep.mubr.f32.mxu0 0.0
    %230 = vmatmul.mubr.f32.gmra.mrb[0].mxu0 %v118
    %v231 = vpop.f32.mrb[0].mxu0
    %v232 = vadd.f32 %v66, %v231
    %v233 = vpop.f32.mrb[0].mxu0
    %v234 = vadd.f32 %v70, %v233
    %235 = vmatprep.mubr.f32.mxu0 0.0
    %236 = vmatmul.mubr.f32.gmra.mrb[0].mxu0 %v121
    %v237 = vpop.f32.mrb[0].mxu0
    %v238 = vadd.f32 %v66, %v237
    %v239 = vpop.f32.mrb[0].mxu0
    %v240 = vadd.f32 %v70, %v239
    %241 = vmatprep.mubr.f32.mxu0 0.0
    %242 = vmatmul.mubr.f32.gmra.mrb[0].mxu0 %v124
    %v243 = vpop.f32.mrb[0].mxu0
    %v244 = vadd.f32 %v66, %v243
    %v245 = vpop.f32.mrb[0].mxu0
    %v246 = vadd.f32 %v70, %v245
    %247 = vdwg.mxu0
    %248 = vmatprep.subr.mxu0 %v133
    %249 = vmatpush1.msra.mxu0 %v131
    %250 = vmatprep.subr.mxu0 0.0
    %251 = vmatpush1.msra.mxu0 0.0
    %252 = vmatprep.subr.mxu0 0.0
    %253 = vmatpush1.msra.mxu0 0.0
    %254 = vmatprep.subr.mxu0 0.0
    %255 = vmatpush1.msra.mxu0 0.0
    %256 = vmatprep.subr.mxu0 0.0
    %257 = vmatpush1.msra.mxu0 0.0
    %258 = vmatprep.subr.mxu0 0.0
    %259 = vmatpush1.msra.mxu0 0.0
    %260 = vmatprep.subr.mxu0 0.0
    %261 = vmatpush1.msra.mxu0 0.0
    %262 = vmatprep.subr.mxu0 0.0
    %263 = vmatpush1.msra.mxu0 0.0
    %264 = vmatprep.subr.mxu0 0.0
    %265 = vmatpush1.msra.mxu0 0.0
    %266 = vmatprep.subr.mxu0 0.0
    %267 = vmatpush1.msra.mxu0 0.0
    %268 = vmatprep.subr.mxu0 0.0
    %269 = vmatpush1.msra.mxu0 0.0
    %270 = vmatprep.subr.mxu0 0.0
    %271 = vmatpush1.msra.mxu0 0.0
    %272 = vmatprep.subr.mxu0 0.0
    %273 = vmatpush1.msra.mxu0 0.0
    %274 = vmatprep.subr.mxu0 0.0
    %275 = vmatpush1.msra.mxu0 0.0
    %276 = vmatprep.subr.mxu0 0.0
    %277 = vmatpush1.msra.mxu0 0.0
    %278 = vmatprep.subr.mxu0 0.0
    %279 = vmatpush1.msra.mxu0 0.0
    %280 = vmatprep.subr.mxu0 0.0
    %281 = vmatpush1.msra.mxu0 0.0
    %282 = vmatprep.subr.mxu0 0.0
    %283 = vmatpush1.msra.mxu0 0.0
    %284 = vmatprep.subr.mxu0 0.0
    %285 = vmatpush1.msra.mxu0 0.0
    %286 = vmatprep.subr.mxu0 0.0
    %287 = vmatpush1.msra.mxu0 0.0
    %288 = vmatprep.subr.mxu0 0.0
    %289 = vmatpush1.msra.mxu0 0.0
    %290 = vmatprep.subr.mxu0 0.0
    %291 = vmatpush1.msra.mxu0 0.0
    %292 = vmatprep.subr.mxu0 0.0
    %293 = vmatpush1.msra.mxu0 0.0
    %294 = vmatprep.subr.mxu0 0.0
    %295 = vmatpush1.msra.mxu0 0.0
    %296 = vmatprep.subr.mxu0 0.0
    %297 = vmatpush1.msra.mxu0 0.0
    %298 = vmatprep.subr.mxu0 0.0
    %299 = vmatpush1.msra.mxu0 0.0
    %300 = vmatprep.subr.mxu0 0.0
    %301 = vmatpush1.msra.mxu0 0.0
    %302 = vmatprep.subr.mxu0 0.0
    %303 = vmatpush1.msra.mxu0 0.0
    %304 = vmatprep.subr.mxu0 0.0
    %305 = vmatpush1.msra.mxu0 0.0
    %306 = vmatprep.subr.mxu0 0.0
    %307 = vmatpush1.msra.mxu0 0.0
    %308 = vmatprep.subr.mxu0 0.0
    %309 = vmatpush1.msra.mxu0 0.0
    %310 = vmatprep.subr.mxu0 0.0
    %311 = vmatpush1.msra.mxu0 0.0
    %312 = vmatprep.mubr.f32.mxu0 0.0
    %313 = vmatmul.mubr.f32.gmra.mrb[0].mxu0 %v103
    %v314 = vpop.f32.mrb[0].mxu0
    %v315 = vadd.f32 %v74, %v314
    %v316 = vpop.f32.mrb[0].mxu0
    %v317 = vadd.f32 %v78, %v316
    %318 = vmatprep.mubr.f32.mxu0 0.0
    %319 = vmatmul.mubr.f32.gmra.mrb[0].mxu0 %v106
    %v320 = vpop.f32.mrb[0].mxu0
    %v321 = vadd.f32 %v74, %v320
    %v322 = vpop.f32.mrb[0].mxu0
    %v323 = vadd.f32 %v78, %v322
    %324 = vmatprep.mubr.f32.mxu0 0.0
    %325 = vmatmul.mubr.f32.gmra.mrb[0].mxu0 %v109
    %v326 = vpop.f32.mrb[0].mxu0
    %v327 = vadd.f32 %v74, %v326
    %v328 = vpop.f32.mrb[0].mxu0
    %v329 = vadd.f32 %v78, %v328
    %330 = vmatprep.mubr.f32.mxu0 0.0
    %331 = vmatmul.mubr.f32.gmra.mrb[0].mxu0 %v112
    %v332 = vpop.f32.mrb[0].mxu0
    %v333 = vadd.f32 %v74, %v332
    %v334 = vpop.f32.mrb[0].mxu0
    %v335 = vadd.f32 %v78, %v334
    %336 = vmatprep.mubr.f32.mxu0 0.0
    %337 = vmatmul.mubr.f32.gmra.mrb[0].mxu0 %v115
    %v338 = vpop.f32.mrb[0].mxu0
    %v339 = vadd.f32 %v74, %v338
    %v340 = vpop.f32.mrb[0].mxu0
    %v341 = vadd.f32 %v78, %v340
    %342 = vmatprep.mubr.f32.mxu0 0.0
    %343 = vmatmul.mubr.f32.gmra.mrb[0].mxu0 %v118
    %v344 = vpop.f32.mrb[0].mxu0
    %v345 = vadd.f32 %v74, %v344
    %v346 = vpop.f32.mrb[0].mxu0
    %v347 = vadd.f32 %v78, %v346
    %348 = vmatprep.mubr.f32.mxu0 0.0
    %349 = vmatmul.mubr.f32.gmra.mrb[0].mxu0 %v121
    %v350 = vpop.f32.mrb[0].mxu0
    %v351 = vadd.f32 %v74, %v350
    %v352 = vpop.f32.mrb[0].mxu0
    %v353 = vadd.f32 %v78, %v352
    %354 = vmatprep.mubr.f32.mxu0 0.0
    %355 = vmatmul.mubr.f32.gmra.mrb[0].mxu0 %v124
    %v356 = vpop.f32.mrb[0].mxu0
    %v357 = vadd.f32 %v74, %v356
    %v358 = vpop.f32.mrb[0].mxu0
    %v359 = vadd.f32 %v78, %v358
    %360 = vdwg.mxu0
    %361 = vst [vmem:[#allocation2] sm:$0xff] %v202
    %362 = vst [vmem:[#allocation2 + $0x8] sm:$0xff] %v204
    %363 = vst [vmem:[#allocation2 + $0x10] sm:$0xff] %v315
    %364 = vst [vmem:[#allocation2 + $0x18] sm:$0xff] %v317
    %365 = vst [vmem:[#allocation2 + $0x20] sm:$0xff] %v208
    %366 = vst [vmem:[#allocation2 + $0x28] sm:$0xff] %v210
    %367 = vst [vmem:[#allocation2 + $0x30] sm:$0xff] %v321
    %368 = vst [vmem:[#allocation2 + $0x38] sm:$0xff] %v323
    %369 = vst [vmem:[#allocation2 + $0x40] sm:$0xff] %v214
    %370 = vst [vmem:[#allocation2 + $0x48] sm:$0xff] %v216
    %371 = vst [vmem:[#allocation2 + $0x50] sm:$0xff] %v327
    %372 = vst [vmem:[#allocation2 + $0x58] sm:$0xff] %v329
    %373 = vst [vmem:[#allocation2 + $0x60] sm:$0xff] %v220
    %374 = vst [vmem:[#allocation2 + $0x68] sm:$0xff] %v222
    %375 = vst [vmem:[#allocation2 + $0x70] sm:$0xff] %v333
    %376 = vst [vmem:[#allocation2 + $0x78] sm:$0xff] %v335
    %377 = vst [vmem:[#allocation2 + $0x80] sm:$0xff] %v226
    %378 = vst [vmem:[#allocation2 + $0x88] sm:$0xff] %v228
    %379 = vst [vmem:[#allocation2 + $0x90] sm:$0xff] %v339
    %380 = vst [vmem:[#allocation2 + $0x98] sm:$0xff] %v341
    %381 = vst [vmem:[#allocation2 + $0xa0] sm:$0xff] %v232
    %382 = vst [vmem:[#allocation2 + $0xa8] sm:$0xff] %v234
    %383 = vst [vmem:[#allocation2 + $0xb0] sm:$0xff] %v345
    %384 = vst [vmem:[#allocation2 + $0xb8] sm:$0xff] %v347
    %385 = vst [vmem:[#allocation2 + $0xc0] sm:$0xff] %v238
    %386 = vst [vmem:[#allocation2 + $0xc8] sm:$0xff] %v240
    %387 = vst [vmem:[#allocation2 + $0xd0] sm:$0xff] %v351
    %388 = vst [vmem:[#allocation2 + $0xd8] sm:$0xff] %v353
    %389 = vst [vmem:[#allocation2 + $0xe0] sm:$0xff] %v244
    %390 = vst [vmem:[#allocation2 + $0xe8] sm:$0xff] %v246
    %391 = vst [vmem:[#allocation2 + $0xf0] sm:$0xff] %v357
    %392 = vst [vmem:[#allocation2 + $0xf8] sm:$0xff] %v359
    %v393 = vld [vmem:[#allocation3] sm:$0xff]
    %v394 = vld [vmem:[#allocation3 + $0x8] sm:$0xff]
    %v395 = vld [vmem:[#allocation3 + $0x10] sm:$0xff]
    %v396 = vld [vmem:[#allocation3 + $0x18] sm:$0xff]
    %v397 = vld [vmem:[#allocation3 + $0x20] sm:$0xff]
    %v398 = vld [vmem:[#allocation3 + $0x28] sm:$0xff]
    %v399 = vld [vmem:[#allocation3 + $0x30] sm:$0xff]
    %v400 = vld [vmem:[#allocation3 + $0x38] sm:$0xff]
    %v401 = vld [vmem:[#allocation3 + $0x40] sm:$0xff]
    %v402 = vld [vmem:[#allocation3 + $0x48] sm:$0xff]
    %v403 = vld [vmem:[#allocation3 + $0x50] sm:$0xff]
    %v404 = vld [vmem:[#allocation3 + $0x58] sm:$0xff]
    %v405 = vld [vmem:[#allocation3 + $0x60] sm:$0xff]
    %v406 = vld [vmem:[#allocation3 + $0x68] sm:$0xff]
    %v407 = vld [vmem:[#allocation3 + $0x70] sm:$0xff]
    %v408 = vld [vmem:[#allocation3 + $0x78] sm:$0xff]
    %v409 = vld [vmem:[#allocation3 + $0x80] sm:$0xff]
    %v410 = vld [vmem:[#allocation3 + $0x88] sm:$0xff]
    %v411 = vld [vmem:[#allocation3 + $0x90] sm:$0xff]
    %v412 = vld [vmem:[#allocation3 + $0x98] sm:$0xff]
    %v413 = vld [vmem:[#allocation3 + $0xa0] sm:$0xff]
    %v414 = vld [vmem:[#allocation3 + $0xa8] sm:$0xff]
    %v415 = vld [vmem:[#allocation3 + $0xb0] sm:$0xff]
    %v416 = vld [vmem:[#allocation3 + $0xb8] sm:$0xff]
    %v417 = vld [vmem:[#allocation3 + $0xc0] sm:$0xff]
    %v418 = vld [vmem:[#allocation3 + $0xc8] sm:$0xff]
    %v419 = vld [vmem:[#allocation3 + $0xd0] sm:$0xff]
    %v420 = vld [vmem:[#allocation3 + $0xd8] sm:$0xff]
    %v421 = vld [vmem:[#allocation3 + $0xe0] sm:$0xff]
    %v422 = vld [vmem:[#allocation3 + $0xe8] sm:$0xff]
    %v423 = vld [vmem:[#allocation3 + $0xf0] sm:$0xff]
    %v424 = vld [vmem:[#allocation3 + $0xf8] sm:$0xff]
    %v425 = vld [vmem:[#allocation3 + $0x100] sm:$0xff]
    %v426 = vld [vmem:[#allocation3 + $0x108] sm:$0xff]
    %v427 = vld [vmem:[#allocation3 + $0x110] sm:$0xff]
    %v428 = vld [vmem:[#allocation3 + $0x118] sm:$0xff]
    %v429 = vld [vmem:[#allocation3 + $0x120] sm:$0xff]
    %v430 = vld [vmem:[#allocation3 + $0x128] sm:$0xff]
    %v431 = vld [vmem:[#allocation3 + $0x130] sm:$0xff]
    %v432 = vld [vmem:[#allocation3 + $0x138] sm:$0xff]
    %v433 = vld [vmem:[#allocation3 + $0x140] sm:$0xff]
    %v434 = vld [vmem:[#allocation3 + $0x148] sm:$0xff]
    %v435 = vld [vmem:[#allocation3 + $0x150] sm:$0xff]
    %v436 = vld [vmem:[#allocation3 + $0x158] sm:$0xff]
    %v437 = vld [vmem:[#allocation3 + $0x160] sm:$0xff]
    %v438 = vld [vmem:[#allocation3 + $0x168] sm:$0xff]
    %v439 = vld [vmem:[#allocation3 + $0x170] sm:$0xff]
    %v440 = vld [vmem:[#allocation3 + $0x178] sm:$0xff]
    %v441 = vld [vmem:[#allocation3 + $0x180] sm:$0xff]
    %v442 = vld [vmem:[#allocation3 + $0x188] sm:$0xff]
    %v443 = vld [vmem:[#allocation3 + $0x190] sm:$0xff]
    %v444 = vld [vmem:[#allocation3 + $0x198] sm:$0xff]
    %v445 = vld [vmem:[#allocation3 + $0x1a0] sm:$0xff]
    %v446 = vld [vmem:[#allocation3 + $0x1a8] sm:$0xff]
    %v447 = vld [vmem:[#allocation3 + $0x1b0] sm:$0xff]
    %v448 = vld [vmem:[#allocation3 + $0x1b8] sm:$0xff]
    %v449 = vld [vmem:[#allocation3 + $0x1c0] sm:$0xff]
    %v450 = vld [vmem:[#allocation3 + $0x1c8] sm:$0xff]
    %v451 = vld [vmem:[#allocation3 + $0x1d0] sm:$0xff]
    %v452 = vld [vmem:[#allocation3 + $0x1d8] sm:$0xff]
    %v453 = vld [vmem:[#allocation3 + $0x1e0] sm:$0xff]
    %v454 = vld [vmem:[#allocation3 + $0x1e8] sm:$0xff]
    %v455 = vld [vmem:[#allocation3 + $0x1f0] sm:$0xff]
    %v456 = vld [vmem:[#allocation3 + $0x1f8] sm:$0xff]
    %v457 = vld [vmem:[#allocation2] sm:$0xff]
    %v458 = vld [vmem:[#allocation2 + $0x8] sm:$0xff]
    %v459 = vld [vmem:[#allocation2 + $0x10] sm:$0xff]
    %v460 = vld [vmem:[#allocation2 + $0x18] sm:$0xff]
    %461 = vmatprep.subr.mxu0 %v394
    %462 = vmatpush1.msra.mxu0 %v393
    %463 = vmatprep.subr.mxu0 %v398
    %464 = vmatpush1.msra.mxu0 %v397
    %465 = vmatprep.subr.mxu0 %v402
    %466 = vmatpush1.msra.mxu0 %v401
    %467 = vmatprep.subr.mxu0 %v406
    %468 = vmatpush1.msra.mxu0 %v405
    %469 = vmatprep.subr.mxu0 %v410
    %470 = vmatpush1.msra.mxu0 %v409
    %471 = vmatprep.subr.mxu0 %v414
    %472 = vmatpush1.msra.mxu0 %v413
    %473 = vmatprep.subr.mxu0 %v418
    %474 = vmatpush1.msra.mxu0 %v417
    %475 = vmatprep.subr.mxu0 %v422
    %476 = vmatpush1.msra.mxu0 %v421
    %477 = vmatprep.subr.mxu0 %v426
    %478 = vmatpush1.msra.mxu0 %v425
    %479 = vmatprep.subr.mxu0 %v430
    %480 = vmatpush1.msra.mxu0 %v429
    %481 = vmatprep.subr.mxu0 %v434
    %482 = vmatpush1.msra.mxu0 %v433
    %483 = vmatprep.subr.mxu0 %v438
    %484 = vmatpush1.msra.mxu0 %v437
    %485 = vmatprep.subr.mxu0 %v442
    %486 = vmatpush1.msra.mxu0 %v441
    %487 = vmatprep.subr.mxu0 %v446
    %488 = vmatpush1.msra.mxu0 %v445
    %489 = vmatprep.subr.mxu0 %v450
    %490 = vmatpush1.msra.mxu0 %v449
    %491 = vmatprep.subr.mxu0 %v454
    %492 = vmatpush1.msra.mxu0 %v453
    %493 = vmatprep.subr.mxu0 0.0
    %494 = vmatpush1.msra.mxu0 0.0
    %495 = vmatprep.subr.mxu0 0.0
    %496 = vmatpush1.msra.mxu0 0.0
    %497 = vmatprep.subr.mxu0 0.0
    %498 = vmatpush1.msra.mxu0 0.0
    %499 = vmatprep.subr.mxu0 0.0
    %500 = vmatpush1.msra.mxu0 0.0
    %501 = vmatprep.subr.mxu0 0.0
    %502 = vmatpush1.msra.mxu0 0.0
    %503 = vmatprep.subr.mxu0 0.0
    %504 = vmatpush1.msra.mxu0 0.0
    %505 = vmatprep.subr.mxu0 0.0
    %506 = vmatpush1.msra.mxu0 0.0
    %507 = vmatprep.subr.mxu0 0.0
    %508 = vmatpush1.msra.mxu0 0.0
    %509 = vmatprep.subr.mxu0 0.0
    %510 = vmatpush1.msra.mxu0 0.0
    %511 = vmatprep.subr.mxu0 0.0
    %512 = vmatpush1.msra.mxu0 0.0
    %513 = vmatprep.subr.mxu0 0.0
    %514 = vmatpush1.msra.mxu0 0.0
    %515 = vmatprep.subr.mxu0 0.0
    %516 = vmatpush1.msra.mxu0 0.0
    %517 = vmatprep.subr.mxu0 0.0
    %518 = vmatpush1.msra.mxu0 0.0
    %519 = vmatprep.subr.mxu0 0.0
    %520 = vmatpush1.msra.mxu0 0.0
    %521 = vmatprep.subr.mxu0 0.0
    %522 = vmatpush1.msra.mxu0 0.0
    %523 = vmatprep.subr.mxu0 0.0
    %524 = vmatpush1.msra.mxu0 0.0
    %525 = vmatprep.mubr.f32.mxu0 0.0
    %526 = vmatmul.mubr.f32.gmra.mrb[0].mxu0 0.0
    %v527 = vpop.f32.mrb[0].mxu0
    %v528 = vadd.f32 0.0, %v527
    %v529 = vpop.f32.mrb[0].mxu0
    %v530 = vadd.f32 0.0, %v529
    %531 = vdwg.mxu0
    %532 = vmatprep.subr.mxu0 %v396
    %533 = vmatpush1.msra.mxu0 %v395
    %534 = vmatprep.subr.mxu0 %v400
    %535 = vmatpush1.msra.mxu0 %v399
    %536 = vmatprep.subr.mxu0 %v404
    %537 = vmatpush1.msra.mxu0 %v403
    %538 = vmatprep.subr.mxu0 %v408
    %539 = vmatpush1.msra.mxu0 %v407
    %540 = vmatprep.subr.mxu0 %v412
    %541 = vmatpush1.msra.mxu0 %v411
    %542 = vmatprep.subr.mxu0 %v416
    %543 = vmatpush1.msra.mxu0 %v415
    %544 = vmatprep.subr.mxu0 %v420
    %545 = vmatpush1.msra.mxu0 %v419
    %546 = vmatprep.subr.mxu0 %v424
    %547 = vmatpush1.msra.mxu0 %v423
    %548 = vmatprep.subr.mxu0 %v428
    %549 = vmatpush1.msra.mxu0 %v427
    %550 = vmatprep.subr.mxu0 %v432
    %551 = vmatpush1.msra.mxu0 %v431
    %552 = vmatprep.subr.mxu0 %v436
    %553 = vmatpush1.msra.mxu0 %v435
    %554 = vmatprep.subr.mxu0 %v440
    %555 = vmatpush1.msra.mxu0 %v439
    %556 = vmatprep.subr.mxu0 %v444
    %557 = vmatpush1.msra.mxu0 %v443
    %558 = vmatprep.subr.mxu0 %v448
    %559 = vmatpush1.msra.mxu0 %v447
    %560 = vmatprep.subr.mxu0 %v452
    %561 = vmatpush1.msra.mxu0 %v451
    %562 = vmatprep.subr.mxu0 %v456
    %563 = vmatpush1.msra.mxu0 %v455
    %564 = vmatprep.subr.mxu0 0.0
    %565 = vmatpush1.msra.mxu0 0.0
    %566 = vmatprep.subr.mxu0 0.0
    %567 = vmatpush1.msra.mxu0 0.0
    %568 = vmatprep.subr.mxu0 0.0
    %569 = vmatpush1.msra.mxu0 0.0
    %570 = vmatprep.subr.mxu0 0.0
    %571 = vmatpush1.msra.mxu0 0.0
    %572 = vmatprep.subr.mxu0 0.0
    %573 = vmatpush1.msra.mxu0 0.0
    %574 = vmatprep.subr.mxu0 0.0
    %575 = vmatpush1.msra.mxu0 0.0
    %576 = vmatprep.subr.mxu0 0.0
    %577 = vmatpush1.msra.mxu0 0.0
    %578 = vmatprep.subr.mxu0 0.0
    %579 = vmatpush1.msra.mxu0 0.0
    %580 = vmatprep.subr.mxu0 0.0
    %581 = vmatpush1.msra.mxu0 0.0
    %582 = vmatprep.subr.mxu0 0.0
    %583 = vmatpush1.msra.mxu0 0.0
    %584 = vmatprep.subr.mxu0 0.0
    %585 = vmatpush1.msra.mxu0 0.0
    %586 = vmatprep.subr.mxu0 0.0
    %587 = vmatpush1.msra.mxu0 0.0
    %588 = vmatprep.subr.mxu0 0.0
    %589 = vmatpush1.msra.mxu0 0.0
    %590 = vmatprep.subr.mxu0 0.0
    %591 = vmatpush1.msra.mxu0 0.0
    %592 = vmatprep.subr.mxu0 0.0
    %593 = vmatpush1.msra.mxu0 0.0
    %594 = vmatprep.subr.mxu0 0.0
    %595 = vmatpush1.msra.mxu0 0.0
    %596 = vmatprep.mubr.f32.mxu0 0.0
    %597 = vmatmul.mubr.f32.gmra.mrb[0].mxu0 0.0
    %v598 = vpop.f32.mrb[0].mxu0
    %v599 = vadd.f32 0.0, %v598
    %v600 = vpop.f32.mrb[0].mxu0
    %v601 = vadd.f32 0.0, %v600
    %602 = vdwg.mxu0
    %v603 = vadd.f32 %v457, %v528
    %v604 = vadd.f32 %v458, %v530
    %v605 = vadd.f32 %v459, %v599
    %v606 = vadd.f32 %v460, %v601
    %v607 = vxor.u32 %v603, 2147483648
    %v608 = vmul.f32 %v607, 1.442695
    %v609 = vpow.pop %v608
    %v610 = vadd.f32 %v609, 1.0
    %v611 = vrcp.pop %v610
    %v612 = vmul.f32 1.0, %v611
    %v613 = vxor.u32 %v604, 2147483648
    %v614 = vmul.f32 %v613, 1.442695
    %v615 = vpow.pop %v614
    %v616 = vadd.f32 %v615, 1.0
    %v617 = vrcp.pop %v616
    %v618 = vmul.f32 1.0, %v617
    %v619 = vtanh.pop %v605
    %v620 = vxor.u32 %v606, 2147483648
    %v621 = vmul.f32 %v620, 1.442695
    %v622 = vpow.pop %v621
    %v623 = vadd.f32 %v622, 1.0
    %v624 = vrcp.pop %v623
    %v625 = vmul.f32 1.0, %v624
    %v626 = vmul.f32 %v618, 0.0
    %v627 = vmul.f32 %v612, %v619
    %v628 = vadd.f32 %v626, %v627
    %v629 = vtanh.pop %v628
    %v630 = vmul.f32 %v625, %v629
    %s631 = scalar_lea.vmem [#allocation2], 32
    %v632 = vld [vmem:[%s631] sm:$0xff]
    %v633 = vld [vmem:[%s631 + $0x8] sm:$0xff]
    %v634 = vld [vmem:[%s631 + $0x10] sm:$0xff]
    %v635 = vld [vmem:[%s631 + $0x18] sm:$0xff]
    %636 = vmatprep.subr.mxu0 %v394
    %637 = vmatpush1.msra.mxu0 %v393
    %638 = vmatprep.subr.mxu0 %v398
    %639 = vmatpush1.msra.mxu0 %v397
    %640 = vmatprep.subr.mxu0 %v402
    %641 = vmatpush1.msra.mxu0 %v401
    %642 = vmatprep.subr.mxu0 %v406
    %643 = vmatpush1.msra.mxu0 %v405
    %644 = vmatprep.subr.mxu0 %v410
    %645 = vmatpush1.msra.mxu0 %v409
    %646 = vmatprep.subr.mxu0 %v414
    %647 = vmatpush1.msra.mxu0 %v413
    %648 = vmatprep.subr.mxu0 %v418
    %649 = vmatpush1.msra.mxu0 %v417
    %650 = vmatprep.subr.mxu0 %v422
    %651 = vmatpush1.msra.mxu0 %v421
    %652 = vmatprep.subr.mxu0 %v426
    %653 = vmatpush1.msra.mxu0 %v425
    %654 = vmatprep.subr.mxu0 %v430
    %655 = vmatpush1.msra.mxu0 %v429
    %656 = vmatprep.subr.mxu0 %v434
    %657 = vmatpush1.msra.mxu0 %v433
    %658 = vmatprep.subr.mxu0 %v438
    %659 = vmatpush1.msra.mxu0 %v437
    %660 = vmatprep.subr.mxu0 %v442
    %661 = vmatpush1.msra.mxu0 %v441
    %662 = vmatprep.subr.mxu0 %v446
    %663 = vmatpush1.msra.mxu0 %v445
    %664 = vmatprep.subr.mxu0 %v450
    %665 = vmatpush1.msra.mxu0 %v449
    %666 = vmatprep.subr.mxu0 %v454
    %667 = vmatpush1.msra.mxu0 %v453
    %668 = vmatprep.subr.mxu0 0.0
    %669 = vmatpush1.msra.mxu0 0.0
    %670 = vmatprep.subr.mxu0 0.0
    %671 = vmatpush1.msra.mxu0 0.0
    %672 = vmatprep.subr.mxu0 0.0
    %673 = vmatpush1.msra.mxu0 0.0
    %674 = vmatprep.subr.mxu0 0.0
    %675 = vmatpush1.msra.mxu0 0.0
    %676 = vmatprep.subr.mxu0 0.0
    %677 = vmatpush1.msra.mxu0 0.0
    %678 = vmatprep.subr.mxu0 0.0
    %679 = vmatpush1.msra.mxu0 0.0
    %680 = vmatprep.subr.mxu0 0.0
    %681 = vmatpush1.msra.mxu0 0.0
    %682 = vmatprep.subr.mxu0 0.0
    %683 = vmatpush1.msra.mxu0 0.0
    %684 = vmatprep.subr.mxu0 0.0
    %685 = vmatpush1.msra.mxu0 0.0
    %686 = vmatprep.subr.mxu0 0.0
    %687 = vmatpush1.msra.mxu0 0.0
    %688 = vmatprep.subr.mxu0 0.0
    %689 = vmatpush1.msra.mxu0 0.0
    %690 = vmatprep.subr.mxu0 0.0
    %691 = vmatpush1.msra.mxu0 0.0
    %692 = vmatprep.subr.mxu0 0.0
    %693 = vmatpush1.msra.mxu0 0.0
    %694 = vmatprep.subr.mxu0 0.0
    %695 = vmatpush1.msra.mxu0 0.0
    %696 = vmatprep.subr.mxu0 0.0
    %697 = vmatpush1.msra.mxu0 0.0
    %698 = vmatprep.subr.mxu0 0.0
    %699 = vmatpush1.msra.mxu0 0.0
    %700 = vmatprep.mubr.f32.mxu0 0.0
    %701 = vmatmul.mubr.f32.gmra.mrb[0].mxu0 %v630
    %v702 = vpop.f32.mrb[0].mxu0
    %v703 = vadd.f32 0.0, %v702
    %v704 = vpop.f32.mrb[0].mxu0
    %v705 = vadd.f32 0.0, %v704
    %706 = vdwg.mxu0
    %707 = vmatprep.subr.mxu0 %v396
    %708 = vmatpush1.msra.mxu0 %v395
    %709 = vmatprep.subr.mxu0 %v400
    %710 = vmatpush1.msra.mxu0 %v399
    %711 = vmatprep.subr.mxu0 %v404
    %712 = vmatpush1.msra.mxu0 %v403
    %713 = vmatprep.subr.mxu0 %v408
    %714 = vmatpush1.msra.mxu0 %v407
    %715 = vmatprep.subr.mxu0 %v412
    %716 = vmatpush1.msra.mxu0 %v411
    %717 = vmatprep.subr.mxu0 %v416
    %718 = vmatpush1.msra.mxu0 %v415
    %719 = vmatprep.subr.mxu0 %v420
    %720 = vmatpush1.msra.mxu0 %v419
    %721 = vmatprep.subr.mxu0 %v424
    %722 = vmatpush1.msra.mxu0 %v423
    %723 = vmatprep.subr.mxu0 %v428
    %724 = vmatpush1.msra.mxu0 %v427
    %725 = vmatprep.subr.mxu0 %v432
    %726 = vmatpush1.msra.mxu0 %v431
    %727 = vmatprep.subr.mxu0 %v436
    %728 = vmatpush1.msra.mxu0 %v435
    %729 = vmatprep.subr.mxu0 %v440
    %730 = vmatpush1.msra.mxu0 %v439
    %731 = vmatprep.subr.mxu0 %v444
    %732 = vmatpush1.msra.mxu0 %v443
    %733 = vmatprep.subr.mxu0 %v448
    %734 = vmatpush1.msra.mxu0 %v447
    %735 = vmatprep.subr.mxu0 %v452
    %736 = vmatpush1.msra.mxu0 %v451
    %737 = vmatprep.subr.mxu0 %v456
    %738 = vmatpush1.msra.mxu0 %v455
    %739 = vmatprep.subr.mxu0 0.0
    %740 = vmatpush1.msra.mxu0 0.0
    %741 = vmatprep.subr.mxu0 0.0
    %742 = vmatpush1.msra.mxu0 0.0
    %743 = vmatprep.subr.mxu0 0.0
    %744 = vmatpush1.msra.mxu0 0.0
    %745 = vmatprep.subr.mxu0 0.0
    %746 = vmatpush1.msra.mxu0 0.0
    %747 = vmatprep.subr.mxu0 0.0
    %748 = vmatpush1.msra.mxu0 0.0
    %749 = vmatprep.subr.mxu0 0.0
    %750 = vmatpush1.msra.mxu0 0.0
    %751 = vmatprep.subr.mxu0 0.0
    %752 = vmatpush1.msra.mxu0 0.0
    %753 = vmatprep.subr.mxu0 0.0
    %754 = vmatpush1.msra.mxu0 0.0
    %755 = vmatprep.subr.mxu0 0.0
    %756 = vmatpush1.msra.mxu0 0.0
    %757 = vmatprep.subr.mxu0 0.0
    %758 = vmatpush1.msra.mxu0 0.0
    %759 = vmatprep.subr.mxu0 0.0
    %760 = vmatpush1.msra.mxu0 0.0
    %761 = vmatprep.subr.mxu0 0.0
    %762 = vmatpush1.msra.mxu0 0.0
    %763 = vmatprep.subr.mxu0 0.0
    %764 = vmatpush1.msra.mxu0 0.0
    %765 = vmatprep.subr.mxu0 0.0
    %766 = vmatpush1.msra.mxu0 0.0
    %767 = vmatprep.subr.mxu0 0.0
    %768 = vmatpush1.msra.mxu0 0.0
    %769 = vmatprep.subr.mxu0 0.0
    %770 = vmatpush1.msra.mxu0 0.0
    %771 = vmatprep.mubr.f32.mxu0 0.0
    %772 = vmatmul.mubr.f32.gmra.mrb[0].mxu0 %v630
    %v773 = vpop.f32.mrb[0].mxu0
    %v774 = vadd.f32 0.0, %v773
    %v775 = vpop.f32.mrb[0].mxu0
    %v776 = vadd.f32 0.0, %v775
    %777 = vdwg.mxu0
    %v778 = vadd.f32 %v632, %v703
    %v779 = vadd.f32 %v633, %v705
    %v780 = vadd.f32 %v634, %v774
    %v781 = vadd.f32 %v635, %v776
    %v782 = vxor.u32 %v778, 2147483648
    %v783 = vmul.f32 %v782, 1.442695
    %v784 = vpow.pop %v783
    %v785 = vadd.f32 %v784, 1.0
    %v786 = vrcp.pop %v785
    %v787 = vmul.f32 1.0, %v786
    %v788 = vxor.u32 %v779, 2147483648
    %v789 = vmul.f32 %v788, 1.442695
    %v790 = vpow.pop %v789
    %v791 = vadd.f32 %v790, 1.0
    %v792 = vrcp.pop %v791
    %v793 = vmul.f32 1.0, %v792
    %v794 = vtanh.pop %v780
    %v795 = vxor.u32 %v781, 2147483648
    %v796 = vmul.f32 %v795, 1.442695
    %v797 = vpow.pop %v796
    %v798 = vadd.f32 %v797, 1.0
    %v799 = vrcp.pop %v798
    %v800 = vmul.f32 1.0, %v799
    %v801 = vmul.f32 %v793, %v628
    %v802 = vmul.f32 %v787, %v794
    %v803 = vadd.f32 %v801, %v802
    %v804 = vtanh.pop %v803
    %v805 = vmul.f32 %v800, %v804
    %s806 = scalar_lea.vmem [#allocation2], 64
    %v807 = vld [vmem:[%s806] sm:$0xff]
    %v808 = vld [vmem:[%s806 + $0x8] sm:$0xff]
    %v809 = vld [vmem:[%s806 + $0x10] sm:$0xff]
    %v810 = vld [vmem:[%s806 + $0x18] sm:$0xff]
    %811 = vmatprep.subr.mxu0 %v394
    %812 = vmatpush1.msra.mxu0 %v393
    %813 = vmatprep.subr.mxu0 %v398
    %814 = vmatpush1.msra.mxu0 %v397
    %815 = vmatprep.subr.mxu0 %v402
    %816 = vmatpush1.msra.mxu0 %v401
    %817 = vmatprep.subr.mxu0 %v406
    %818 = vmatpush1.msra.mxu0 %v405
    %819 = vmatprep.subr.mxu0 %v410
    %820 = vmatpush1.msra.mxu0 %v409
    %821 = vmatprep.subr.mxu0 %v414
    %822 = vmatpush1.msra.mxu0 %v413
    %823 = vmatprep.subr.mxu0 %v418
    %824 = vmatpush1.msra.mxu0 %v417
    %825 = vmatprep.subr.mxu0 %v422
    %826 = vmatpush1.msra.mxu0 %v421
    %827 = vmatprep.subr.mxu0 %v426
    %828 = vmatpush1.msra.mxu0 %v425
    %829 = vmatprep.subr.mxu0 %v430
    %830 = vmatpush1.msra.mxu0 %v429
    %831 = vmatprep.subr.mxu0 %v434
    %832 = vmatpush1.msra.mxu0 %v433
    %833 = vmatprep.subr.mxu0 %v438
    %834 = vmatpush1.msra.mxu0 %v437
    %835 = vmatprep.subr.mxu0 %v442
    %836 = vmatpush1.msra.mxu0 %v441
    %837 = vmatprep.subr.mxu0 %v446
    %838 = vmatpush1.msra.mxu0 %v445
    %839 = vmatprep.subr.mxu0 %v450
    %840 = vmatpush1.msra.mxu0 %v449
    %841 = vmatprep.subr.mxu0 %v454
    %842 = vmatpush1.msra.mxu0 %v453
    %843 = vmatprep.subr.mxu0 0.0
    %844 = vmatpush1.msra.mxu0 0.0
    %845 = vmatprep.subr.mxu0 0.0
    %846 = vmatpush1.msra.mxu0 0.0
    %847 = vmatprep.subr.mxu0 0.0
    %848 = vmatpush1.msra.mxu0 0.0
    %849 = vmatprep.subr.mxu0 0.0
    %850 = vmatpush1.msra.mxu0 0.0
    %851 = vmatprep.subr.mxu0 0.0
    %852 = vmatpush1.msra.mxu0 0.0
    %853 = vmatprep.subr.mxu0 0.0
    %854 = vmatpush1.msra.mxu0 0.0
    %855 = vmatprep.subr.mxu0 0.0
    %856 = vmatpush1.msra.mxu0 0.0
    %857 = vmatprep.subr.mxu0 0.0
    %858 = vmatpush1.msra.mxu0 0.0
    %859 = vmatprep.subr.mxu0 0.0
    %860 = vmatpush1.msra.mxu0 0.0
    %861 = vmatprep.subr.mxu0 0.0
    %862 = vmatpush1.msra.mxu0 0.0
    %863 = vmatprep.subr.mxu0 0.0
    %864 = vmatpush1.msra.mxu0 0.0
    %865 = vmatprep.subr.mxu0 0.0
    %866 = vmatpush1.msra.mxu0 0.0
    %867 = vmatprep.subr.mxu0 0.0
    %868 = vmatpush1.msra.mxu0 0.0
    %869 = vmatprep.subr.mxu0 0.0
    %870 = vmatpush1.msra.mxu0 0.0
    %871 = vmatprep.subr.mxu0 0.0
    %872 = vmatpush1.msra.mxu0 0.0
    %873 = vmatprep.subr.mxu0 0.0
    %874 = vmatpush1.msra.mxu0 0.0
    %875 = vmatprep.mubr.f32.mxu0 0.0
    %876 = vmatmul.mubr.f32.gmra.mrb[0].mxu0 %v805
    %v877 = vpop.f32.mrb[0].mxu0
    %v878 = vadd.f32 0.0, %v877
    %v879 = vpop.f32.mrb[0].mxu0
    %v880 = vadd.f32 0.0, %v879
    %881 = vdwg.mxu0
    %882 = vmatprep.subr.mxu0 %v396
    %883 = vmatpush1.msra.mxu0 %v395
    %884 = vmatprep.subr.mxu0 %v400
    %885 = vmatpush1.msra.mxu0 %v399
    %886 = vmatprep.subr.mxu0 %v404
    %887 = vmatpush1.msra.mxu0 %v403
    %888 = vmatprep.subr.mxu0 %v408
    %889 = vmatpush1.msra.mxu0 %v407
    %890 = vmatprep.subr.mxu0 %v412
    %891 = vmatpush1.msra.mxu0 %v411
    %892 = vmatprep.subr.mxu0 %v416
    %893 = vmatpush1.msra.mxu0 %v415
    %894 = vmatprep.subr.mxu0 %v420
    %895 = vmatpush1.msra.mxu0 %v419
    %896 = vmatprep.subr.mxu0 %v424
    %897 = vmatpush1.msra.mxu0 %v423
    %898 = vmatprep.subr.mxu0 %v428
    %899 = vmatpush1.msra.mxu0 %v427
    %900 = vmatprep.subr.mxu0 %v432
    %901 = vmatpush1.msra.mxu0 %v431
    %902 = vmatprep.subr.mxu0 %v436
    %903 = vmatpush1.msra.mxu0 %v435
    %904 = vmatprep.subr.mxu0 %v440
    %905 = vmatpush1.msra.mxu0 %v439
    %906 = vmatprep.subr.mxu0 %v444
    %907 = vmatpush1.msra.mxu0 %v443
    %908 = vmatprep.subr.mxu0 %v448
    %909 = vmatpush1.msra.mxu0 %v447
    %910 = vmatprep.subr.mxu0 %v452
    %911 = vmatpush1.msra.mxu0 %v451
    %912 = vmatprep.subr.mxu0 %v456
    %913 = vmatpush1.msra.mxu0 %v455
    %914 = vmatprep.subr.mxu0 0.0
    %915 = vmatpush1.msra.mxu0 0.0
    %916 = vmatprep.subr.mxu0 0.0
    %917 = vmatpush1.msra.mxu0 0.0
    %918 = vmatprep.subr.mxu0 0.0
    %919 = vmatpush1.msra.mxu0 0.0
    %920 = vmatprep.subr.mxu0 0.0
    %921 = vmatpush1.msra.mxu0 0.0
    %922 = vmatprep.subr.mxu0 0.0
    %923 = vmatpush1.msra.mxu0 0.0
    %924 = vmatprep.subr.mxu0 0.0
    %925 = vmatpush1.msra.mxu0 0.0
    %926 = vmatprep.subr.mxu0 0.0
    %927 = vmatpush1.msra.mxu0 0.0
    %928 = vmatprep.subr.mxu0 0.0
    %929 = vmatpush1.msra.mxu0 0.0
    %930 = vmatprep.subr.mxu0 0.0
    %931 = vmatpush1.msra.mxu0 0.0
    %932 = vmatprep.subr.mxu0 0.0
    %933 = vmatpush1.msra.mxu0 0.0
    %934 = vmatprep.subr.mxu0 0.0
    %935 = vmatpush1.msra.mxu0 0.0
    %936 = vmatprep.subr.mxu0 0.0
    %937 = vmatpush1.msra.mxu0 0.0
    %938 = vmatprep.subr.mxu0 0.0
    %939 = vmatpush1.msra.mxu0 0.0
    %940 = vmatprep.subr.mxu0 0.0
    %941 = vmatpush1.msra.mxu0 0.0
    %942 = vmatprep.subr.mxu0 0.0
    %943 = vmatpush1.msra.mxu0 0.0
    %944 = vmatprep.subr.mxu0 0.0
    %945 = vmatpush1.msra.mxu0 0.0
    %946 = vmatprep.mubr.f32.mxu0 0.0
    %947 = vmatmul.mubr.f32.gmra.mrb[0].mxu0 %v805
    %v948 = vpop.f32.mrb[0].mxu0
    %v949 = vadd.f32 0.0, %v948
    %v950 = vpop.f32.mrb[0].mxu0
    %v951 = vadd.f32 0.0, %v950
    %952 = vdwg.mxu0
    %v953 = vadd.f32 %v807, %v878
    %v954 = vadd.f32 %v808, %v880
    %v955 = vadd.f32 %v809, %v949
    %v956 = vadd.f32 %v810, %v951
    %v957 = vxor.u32 %v953, 2147483648
    %v958 = vmul.f32 %v957, 1.442695
    %v959 = vpow.pop %v958
    %v960 = vadd.f32 %v959, 1.0
    %v961 = vrcp.pop %v960
    %v962 = vmul.f32 1.0, %v961
    %v963 = vxor.u32 %v954, 2147483648
    %v964 = vmul.f32 %v963, 1.442695
    %v965 = vpow.pop %v964
    %v966 = vadd.f32 %v965, 1.0
    %v967 = vrcp.pop %v966
    %v968 = vmul.f32 1.0, %v967
    %v969 = vtanh.pop %v955
    %v970 = vxor.u32 %v956, 2147483648
    %v971 = vmul.f32 %v970, 1.442695
    %v972 = vpow.pop %v971
    %v973 = vadd.f32 %v972, 1.0
    %v974 = vrcp.pop %v973
    %v975 = vmul.f32 1.0, %v974
    %v976 = vmul.f32 %v968, %v803
    %v977 = vmul.f32 %v962, %v969
    %v978 = vadd.f32 %v976, %v977
    %v979 = vtanh.pop %v978
    %v980 = vmul.f32 %v975, %v979
    %s981 = scalar_lea.vmem [#allocation2], 96
    %v982 = vld [vmem:[%s981] sm:$0xff]
    %v983 = vld [vmem:[%s981 + $0x8] sm:$0xff]
    %v984 = vld [vmem:[%s981 + $0x10] sm:$0xff]
    %v985 = vld [vmem:[%s981 + $0x18] sm:$0xff]
    %986 = vmatprep.subr.mxu0 %v394
    %987 = vmatpush1.msra.mxu0 %v393
    %988 = vmatprep.subr.mxu0 %v398
    %989 = vmatpush1.msra.mxu0 %v397
    %990 = vmatprep.subr.mxu0 %v402
    %991 = vmatpush1.msra.mxu0 %v401
    %992 = vmatprep.subr.mxu0 %v406
    %993 = vmatpush1.msra.mxu0 %v405
    %994 = vmatprep.subr.mxu0 %v410
    %995 = vmatpush1.msra.mxu0 %v409
    %996 = vmatprep.subr.mxu0 %v414
    %997 = vmatpush1.msra.mxu0 %v413
    %998 = vmatprep.subr.mxu0 %v418
    %999 = vmatpush1.msra.mxu0 %v417
    %1000 = vmatprep.subr.mxu0 %v422
    %1001 = vmatpush1.msra.mxu0 %v421
    %1002 = vmatprep.subr.mxu0 %v426
    %1003 = vmatpush1.msra.mxu0 %v425
    %1004 = vmatprep.subr.mxu0 %v430
    %1005 = vmatpush1.msra.mxu0 %v429
    %1006 = vmatprep.subr.mxu0 %v434
    %1007 = vmatpush1.msra.mxu0 %v433
    %1008 = vmatprep.subr.mxu0 %v438
    %1009 = vmatpush1.msra.mxu0 %v437
    %1010 = vmatprep.subr.mxu0 %v442
    %1011 = vmatpush1.msra.mxu0 %v441
    %1012 = vmatprep.subr.mxu0 %v446
    %1013 = vmatpush1.msra.mxu0 %v445
    %1014 = vmatprep.subr.mxu0 %v450
    %1015 = vmatpush1.msra.mxu0 %v449
    %1016 = vmatprep.subr.mxu0 %v454
    %1017 = vmatpush1.msra.mxu0 %v453
    %1018 = vmatprep.subr.mxu0 0.0
    %1019 = vmatpush1.msra.mxu0 0.0
    %1020 = vmatprep.subr.mxu0 0.0
    %1021 = vmatpush1.msra.mxu0 0.0
    %1022 = vmatprep.subr.mxu0 0.0
    %1023 = vmatpush1.msra.mxu0 0.0
    %1024 = vmatprep.subr.mxu0 0.0
    %1025 = vmatpush1.msra.mxu0 0.0
    %1026 = vmatprep.subr.mxu0 0.0
    %1027 = vmatpush1.msra.mxu0 0.0
    %1028 = vmatprep.subr.mxu0 0.0
    %1029 = vmatpush1.msra.mxu0 0.0
    %1030 = vmatprep.subr.mxu0 0.0
    %1031 = vmatpush1.msra.mxu0 0.0
    %1032 = vmatprep.subr.mxu0 0.0
    %1033 = vmatpush1.msra.mxu0 0.0
    %1034 = vmatprep.subr.mxu0 0.0
    %1035 = vmatpush1.msra.mxu0 0.0
    %1036 = vmatprep.subr.mxu0 0.0
    %1037 = vmatpush1.msra.mxu0 0.0
    %1038 = vmatprep.subr.mxu0 0.0
    %1039 = vmatpush1.msra.mxu0 0.0
    %1040 = vmatprep.subr.mxu0 0.0
    %1041 = vmatpush1.msra.mxu0 0.0
    %1042 = vmatprep.subr.mxu0 0.0
    %1043 = vmatpush1.msra.mxu0 0.0
    %1044 = vmatprep.subr.mxu0 0.0
    %1045 = vmatpush1.msra.mxu0 0.0
    %1046 = vmatprep.subr.mxu0 0.0
    %1047 = vmatpush1.msra.mxu0 0.0
    %1048 = vmatprep.subr.mxu0 0.0
    %1049 = vmatpush1.msra.mxu0 0.0
    %1050 = vmatprep.mubr.f32.mxu0 0.0
    %1051 = vmatmul.mubr.f32.gmra.mrb[0].mxu0 %v980
    %v1052 = vpop.f32.mrb[0].mxu0
    %v1053 = vadd.f32 0.0, %v1052
    %v1054 = vpop.f32.mrb[0].mxu0
    %v1055 = vadd.f32 0.0, %v1054
    %1056 = vdwg.mxu0
    %1057 = vmatprep.subr.mxu0 %v396
    %1058 = vmatpush1.msra.mxu0 %v395
    %1059 = vmatprep.subr.mxu0 %v400
    %1060 = vmatpush1.msra.mxu0 %v399
    %1061 = vmatprep.subr.mxu0 %v404
    %1062 = vmatpush1.msra.mxu0 %v403
    %1063 = vmatprep.subr.mxu0 %v408
    %1064 = vmatpush1.msra.mxu0 %v407
    %1065 = vmatprep.subr.mxu0 %v412
    %1066 = vmatpush1.msra.mxu0 %v411
    %1067 = vmatprep.subr.mxu0 %v416
    %1068 = vmatpush1.msra.mxu0 %v415
    %1069 = vmatprep.subr.mxu0 %v420
    %1070 = vmatpush1.msra.mxu0 %v419
    %1071 = vmatprep.subr.mxu0 %v424
    %1072 = vmatpush1.msra.mxu0 %v423
    %1073 = vmatprep.subr.mxu0 %v428
    %1074 = vmatpush1.msra.mxu0 %v427
    %1075 = vmatprep.subr.mxu0 %v432
    %1076 = vmatpush1.msra.mxu0 %v431
    %1077 = vmatprep.subr.mxu0 %v436
    %1078 = vmatpush1.msra.mxu0 %v435
    %1079 = vmatprep.subr.mxu0 %v440
    %1080 = vmatpush1.msra.mxu0 %v439
    %1081 = vmatprep.subr.mxu0 %v444
    %1082 = vmatpush1.msra.mxu0 %v443
    %1083 = vmatprep.subr.mxu0 %v448
    %1084 = vmatpush1.msra.mxu0 %v447
    %1085 = vmatprep.subr.mxu0 %v452
    %1086 = vmatpush1.msra.mxu0 %v451
    %1087 = vmatprep.subr.mxu0 %v456
    %1088 = vmatpush1.msra.mxu0 %v455
    %1089 = vmatprep.subr.mxu0 0.0
    %1090 = vmatpush1.msra.mxu0 0.0
    %1091 = vmatprep.subr.mxu0 0.0
    %1092 = vmatpush1.msra.mxu0 0.0
    %1093 = vmatprep.subr.mxu0 0.0
    %1094 = vmatpush1.msra.mxu0 0.0
    %1095 = vmatprep.subr.mxu0 0.0
    %1096 = vmatpush1.msra.mxu0 0.0
    %1097 = vmatprep.subr.mxu0 0.0
    %1098 = vmatpush1.msra.mxu0 0.0
    %1099 = vmatprep.subr.mxu0 0.0
    %1100 = vmatpush1.msra.mxu0 0.0
    %1101 = vmatprep.subr.mxu0 0.0
    %1102 = vmatpush1.msra.mxu0 0.0
    %1103 = vmatprep.subr.mxu0 0.0
    %1104 = vmatpush1.msra.mxu0 0.0
    %1105 = vmatprep.subr.mxu0 0.0
    %1106 = vmatpush1.msra.mxu0 0.0
    %1107 = vmatprep.subr.mxu0 0.0
    %1108 = vmatpush1.msra.mxu0 0.0
    %1109 = vmatprep.subr.mxu0 0.0
    %1110 = vmatpush1.msra.mxu0 0.0
    %1111 = vmatprep.subr.mxu0 0.0
    %1112 = vmatpush1.msra.mxu0 0.0
    %1113 = vmatprep.subr.mxu0 0.0
    %1114 = vmatpush1.msra.mxu0 0.0
    %1115 = vmatprep.subr.mxu0 0.0
    %1116 = vmatpush1.msra.mxu0 0.0
    %1117 = vmatprep.subr.mxu0 0.0
    %1118 = vmatpush1.msra.mxu0 0.0
    %1119 = vmatprep.subr.mxu0 0.0
    %1120 = vmatpush1.msra.mxu0 0.0
    %1121 = vmatprep.mubr.f32.mxu0 0.0
    %1122 = vmatmul.mubr.f32.gmra.mrb[0].mxu0 %v980
    %v1123 = vpop.f32.mrb[0].mxu0
    %v1124 = vadd.f32 0.0, %v1123
    %v1125 = vpop.f32.mrb[0].mxu0
    %v1126 = vadd.f32 0.0, %v1125
    %1127 = vdwg.mxu0
    %v1128 = vadd.f32 %v982, %v1053
    %v1129 = vadd.f32 %v983, %v1055
    %v1130 = vadd.f32 %v984, %v1124
    %v1131 = vadd.f32 %v985, %v1126
    %v1132 = vxor.u32 %v1128, 2147483648
    %v1133 = vmul.f32 %v1132, 1.442695
    %v1134 = vpow.pop %v1133
    %v1135 = vadd.f32 %v1134, 1.0
    %v1136 = vrcp.pop %v1135
    %v1137 = vmul.f32 1.0, %v1136
    %v1138 = vxor.u32 %v1129, 2147483648
    %v1139 = vmul.f32 %v1138, 1.442695
    %v1140 = vpow.pop %v1139
    %v1141 = vadd.f32 %v1140, 1.0
    %v1142 = vrcp.pop %v1141
    %v1143 = vmul.f32 1.0, %v1142
    %v1144 = vtanh.pop %v1130
    %v1145 = vxor.u32 %v1131, 2147483648
    %v1146 = vmul.f32 %v1145, 1.442695
    %v1147 = vpow.pop %v1146
    %v1148 = vadd.f32 %v1147, 1.0
    %v1149 = vrcp.pop %v1148
    %v1150 = vmul.f32 1.0, %v1149
    %v1151 = vmul.f32 %v1143, %v978
    %v1152 = vmul.f32 %v1137, %v1144
    %v1153 = vadd.f32 %v1151, %v1152
    %v1154 = vtanh.pop %v1153
    %v1155 = vmul.f32 %v1150, %v1154
    %s1156 = scalar_lea.vmem [#allocation2], 128
    %v1157 = vld [vmem:[%s1156] sm:$0xff]
    %v1158 = vld [vmem:[%s1156 + $0x8] sm:$0xff]
    %v1159 = vld [vmem:[%s1156 + $0x10] sm:$0xff]
    %v1160 = vld [vmem:[%s1156 + $0x18] sm:$0xff]
    %1161 = vmatprep.subr.mxu0 %v394
    %1162 = vmatpush1.msra.mxu0 %v393
    %1163 = vmatprep.subr.mxu0 %v398
    %1164 = vmatpush1.msra.mxu0 %v397
    %1165 = vmatprep.subr.mxu0 %v402
    %1166 = vmatpush1.msra.mxu0 %v401
    %1167 = vmatprep.subr.mxu0 %v406
    %1168 = vmatpush1.msra.mxu0 %v405
    %1169 = vmatprep.subr.mxu0 %v410
    %1170 = vmatpush1.msra.mxu0 %v409
    %1171 = vmatprep.subr.mxu0 %v414
    %1172 = vmatpush1.msra.mxu0 %v413
    %1173 = vmatprep.subr.mxu0 %v418
    %1174 = vmatpush1.msra.mxu0 %v417
    %1175 = vmatprep.subr.mxu0 %v422
    %1176 = vmatpush1.msra.mxu0 %v421
    %1177 = vmatprep.subr.mxu0 %v426
    %1178 = vmatpush1.msra.mxu0 %v425
    %1179 = vmatprep.subr.mxu0 %v430
    %1180 = vmatpush1.msra.mxu0 %v429
    %1181 = vmatprep.subr.mxu0 %v434
    %1182 = vmatpush1.msra.mxu0 %v433
    %1183 = vmatprep.subr.mxu0 %v438
    %1184 = vmatpush1.msra.mxu0 %v437
    %1185 = vmatprep.subr.mxu0 %v442
    %1186 = vmatpush1.msra.mxu0 %v441
    %1187 = vmatprep.subr.mxu0 %v446
    %1188 = vmatpush1.msra.mxu0 %v445
    %1189 = vmatprep.subr.mxu0 %v450
    %1190 = vmatpush1.msra.mxu0 %v449
    %1191 = vmatprep.subr.mxu0 %v454
    %1192 = vmatpush1.msra.mxu0 %v453
    %1193 = vmatprep.subr.mxu0 0.0
    %1194 = vmatpush1.msra.mxu0 0.0
    %1195 = vmatprep.subr.mxu0 0.0
    %1196 = vmatpush1.msra.mxu0 0.0
    %1197 = vmatprep.subr.mxu0 0.0
    %1198 = vmatpush1.msra.mxu0 0.0
    %1199 = vmatprep.subr.mxu0 0.0
    %1200 = vmatpush1.msra.mxu0 0.0
    %1201 = vmatprep.subr.mxu0 0.0
    %1202 = vmatpush1.msra.mxu0 0.0
    %1203 = vmatprep.subr.mxu0 0.0
    %1204 = vmatpush1.msra.mxu0 0.0
    %1205 = vmatprep.subr.mxu0 0.0
    %1206 = vmatpush1.msra.mxu0 0.0
    %1207 = vmatprep.subr.mxu0 0.0
    %1208 = vmatpush1.msra.mxu0 0.0
    %1209 = vmatprep.subr.mxu0 0.0
    %1210 = vmatpush1.msra.mxu0 0.0
    %1211 = vmatprep.subr.mxu0 0.0
    %1212 = vmatpush1.msra.mxu0 0.0
    %1213 = vmatprep.subr.mxu0 0.0
    %1214 = vmatpush1.msra.mxu0 0.0
    %1215 = vmatprep.subr.mxu0 0.0
    %1216 = vmatpush1.msra.mxu0 0.0
    %1217 = vmatprep.subr.mxu0 0.0
    %1218 = vmatpush1.msra.mxu0 0.0
    %1219 = vmatprep.subr.mxu0 0.0
    %1220 = vmatpush1.msra.mxu0 0.0
    %1221 = vmatprep.subr.mxu0 0.0
    %1222 = vmatpush1.msra.mxu0 0.0
    %1223 = vmatprep.subr.mxu0 0.0
    %1224 = vmatpush1.msra.mxu0 0.0
    %1225 = vmatprep.mubr.f32.mxu0 0.0
    %1226 = vmatmul.mubr.f32.gmra.mrb[0].mxu0 %v1155
    %v1227 = vpop.f32.mrb[0].mxu0
    %v1228 = vadd.f32 0.0, %v1227
    %v1229 = vpop.f32.mrb[0].mxu0
    %v1230 = vadd.f32 0.0, %v1229
    %1231 = vdwg.mxu0
    %1232 = vmatprep.subr.mxu0 %v396
    %1233 = vmatpush1.msra.mxu0 %v395
    %1234 = vmatprep.subr.mxu0 %v400
    %1235 = vmatpush1.msra.mxu0 %v399
    %1236 = vmatprep.subr.mxu0 %v404
    %1237 = vmatpush1.msra.mxu0 %v403
    %1238 = vmatprep.subr.mxu0 %v408
    %1239 = vmatpush1.msra.mxu0 %v407
    %1240 = vmatprep.subr.mxu0 %v412
    %1241 = vmatpush1.msra.mxu0 %v411
    %1242 = vmatprep.subr.mxu0 %v416
    %1243 = vmatpush1.msra.mxu0 %v415
    %1244 = vmatprep.subr.mxu0 %v420
    %1245 = vmatpush1.msra.mxu0 %v419
    %1246 = vmatprep.subr.mxu0 %v424
    %1247 = vmatpush1.msra.mxu0 %v423
    %1248 = vmatprep.subr.mxu0 %v428
    %1249 = vmatpush1.msra.mxu0 %v427
    %1250 = vmatprep.subr.mxu0 %v432
    %1251 = vmatpush1.msra.mxu0 %v431
    %1252 = vmatprep.subr.mxu0 %v436
    %1253 = vmatpush1.msra.mxu0 %v435
    %1254 = vmatprep.subr.mxu0 %v440
    %1255 = vmatpush1.msra.mxu0 %v439
    %1256 = vmatprep.subr.mxu0 %v444
    %1257 = vmatpush1.msra.mxu0 %v443
    %1258 = vmatprep.subr.mxu0 %v448
    %1259 = vmatpush1.msra.mxu0 %v447
    %1260 = vmatprep.subr.mxu0 %v452
    %1261 = vmatpush1.msra.mxu0 %v451
    %1262 = vmatprep.subr.mxu0 %v456
    %1263 = vmatpush1.msra.mxu0 %v455
    %1264 = vmatprep.subr.mxu0 0.0
    %1265 = vmatpush1.msra.mxu0 0.0
    %1266 = vmatprep.subr.mxu0 0.0
    %1267 = vmatpush1.msra.mxu0 0.0
    %1268 = vmatprep.subr.mxu0 0.0
    %1269 = vmatpush1.msra.mxu0 0.0
    %1270 = vmatprep.subr.mxu0 0.0
    %1271 = vmatpush1.msra.mxu0 0.0
    %1272 = vmatprep.subr.mxu0 0.0
    %1273 = vmatpush1.msra.mxu0 0.0
    %1274 = vmatprep.subr.mxu0 0.0
    %1275 = vmatpush1.msra.mxu0 0.0
    %1276 = vmatprep.subr.mxu0 0.0
    %1277 = vmatpush1.msra.mxu0 0.0
    %1278 = vmatprep.subr.mxu0 0.0
    %1279 = vmatpush1.msra.mxu0 0.0
    %1280 = vmatprep.subr.mxu0 0.0
    %1281 = vmatpush1.msra.mxu0 0.0
    %1282 = vmatprep.subr.mxu0 0.0
    %1283 = vmatpush1.msra.mxu0 0.0
    %1284 = vmatprep.subr.mxu0 0.0
    %1285 = vmatpush1.msra.mxu0 0.0
    %1286 = vmatprep.subr.mxu0 0.0
    %1287 = vmatpush1.msra.mxu0 0.0
    %1288 = vmatprep.subr.mxu0 0.0
    %1289 = vmatpush1.msra.mxu0 0.0
    %1290 = vmatprep.subr.mxu0 0.0
    %1291 = vmatpush1.msra.mxu0 0.0
    %1292 = vmatprep.subr.mxu0 0.0
    %1293 = vmatpush1.msra.mxu0 0.0
    %1294 = vmatprep.subr.mxu0 0.0
    %1295 = vmatpush1.msra.mxu0 0.0
    %1296 = vmatprep.mubr.f32.mxu0 0.0
    %1297 = vmatmul.mubr.f32.gmra.mrb[0].mxu0 %v1155
    %v1298 = vpop.f32.mrb[0].mxu0
    %v1299 = vadd.f32 0.0, %v1298
    %v1300 = vpop.f32.mrb[0].mxu0
    %v1301 = vadd.f32 0.0, %v1300
    %1302 = vdwg.mxu0
    %v1303 = vadd.f32 %v1157, %v1228
    %v1304 = vadd.f32 %v1158, %v1230
    %v1305 = vadd.f32 %v1159, %v1299
    %v1306 = vadd.f32 %v1160, %v1301
    %v1307 = vxor.u32 %v1303, 2147483648
    %v1308 = vmul.f32 %v1307, 1.442695
    %v1309 = vpow.pop %v1308
    %v1310 = vadd.f32 %v1309, 1.0
    %v1311 = vrcp.pop %v1310
    %v1312 = vmul.f32 1.0, %v1311
    %v1313 = vxor.u32 %v1304, 2147483648
    %v1314 = vmul.f32 %v1313, 1.442695
    %v1315 = vpow.pop %v1314
    %v1316 = vadd.f32 %v1315, 1.0
    %v1317 = vrcp.pop %v1316
    %v1318 = vmul.f32 1.0, %v1317
    %v1319 = vtanh.pop %v1305
    %v1320 = vxor.u32 %v1306, 2147483648
    %v1321 = vmul.f32 %v1320, 1.442695
    %v1322 = vpow.pop %v1321
    %v1323 = vadd.f32 %v1322, 1.0
    %v1324 = vrcp.pop %v1323
    %v1325 = vmul.f32 1.0, %v1324
    %v1326 = vmul.f32 %v1318, %v1153
    %v1327 = vmul.f32 %v1312, %v1319
    %v1328 = vadd.f32 %v1326, %v1327
    %v1329 = vtanh.pop %v1328
    %v1330 = vmul.f32 %v1325, %v1329
    %s1331 = scalar_lea.vmem [#allocation2], 160
    %v1332 = vld [vmem:[%s1331] sm:$0xff]
    %v1333 = vld [vmem:[%s1331 + $0x8] sm:$0xff]
    %v1334 = vld [vmem:[%s1331 + $0x10] sm:$0xff]
    %v1335 = vld [vmem:[%s1331 + $0x18] sm:$0xff]
    %1336 = vmatprep.subr.mxu0 %v394
    %1337 = vmatpush1.msra.mxu0 %v393
    %1338 = vmatprep.subr.mxu0 %v398
    %1339 = vmatpush1.msra.mxu0 %v397
    %1340 = vmatprep.subr.mxu0 %v402
    %1341 = vmatpush1.msra.mxu0 %v401
    %1342 = vmatprep.subr.mxu0 %v406
    %1343 = vmatpush1.msra.mxu0 %v405
    %1344 = vmatprep.subr.mxu0 %v410
    %1345 = vmatpush1.msra.mxu0 %v409
    %1346 = vmatprep.subr.mxu0 %v414
    %1347 = vmatpush1.msra.mxu0 %v413
    %1348 = vmatprep.subr.mxu0 %v418
    %1349 = vmatpush1.msra.mxu0 %v417
    %1350 = vmatprep.subr.mxu0 %v422
    %1351 = vmatpush1.msra.mxu0 %v421
    %1352 = vmatprep.subr.mxu0 %v426
    %1353 = vmatpush1.msra.mxu0 %v425
    %1354 = vmatprep.subr.mxu0 %v430
    %1355 = vmatpush1.msra.mxu0 %v429
    %1356 = vmatprep.subr.mxu0 %v434
    %1357 = vmatpush1.msra.mxu0 %v433
    %1358 = vmatprep.subr.mxu0 %v438
    %1359 = vmatpush1.msra.mxu0 %v437
    %1360 = vmatprep.subr.mxu0 %v442
    %1361 = vmatpush1.msra.mxu0 %v441
    %1362 = vmatprep.subr.mxu0 %v446
    %1363 = vmatpush1.msra.mxu0 %v445
    %1364 = vmatprep.subr.mxu0 %v450
    %1365 = vmatpush1.msra.mxu0 %v449
    %1366 = vmatprep.subr.mxu0 %v454
    %1367 = vmatpush1.msra.mxu0 %v453
    %1368 = vmatprep.subr.mxu0 0.0
    %1369 = vmatpush1.msra.mxu0 0.0
    %1370 = vmatprep.subr.mxu0 0.0
    %1371 = vmatpush1.msra.mxu0 0.0
    %1372 = vmatprep.subr.mxu0 0.0
    %1373 = vmatpush1.msra.mxu0 0.0
    %1374 = vmatprep.subr.mxu0 0.0
    %1375 = vmatpush1.msra.mxu0 0.0
    %1376 = vmatprep.subr.mxu0 0.0
    %1377 = vmatpush1.msra.mxu0 0.0
    %1378 = vmatprep.subr.mxu0 0.0
    %1379 = vmatpush1.msra.mxu0 0.0
    %1380 = vmatprep.subr.mxu0 0.0
    %1381 = vmatpush1.msra.mxu0 0.0
    %1382 = vmatprep.subr.mxu0 0.0
    %1383 = vmatpush1.msra.mxu0 0.0
    %1384 = vmatprep.subr.mxu0 0.0
    %1385 = vmatpush1.msra.mxu0 0.0
    %1386 = vmatprep.subr.mxu0 0.0
    %1387 = vmatpush1.msra.mxu0 0.0
    %1388 = vmatprep.subr.mxu0 0.0
    %1389 = vmatpush1.msra.mxu0 0.0
    %1390 = vmatprep.subr.mxu0 0.0
    %1391 = vmatpush1.msra.mxu0 0.0
    %1392 = vmatprep.subr.mxu0 0.0
    %1393 = vmatpush1.msra.mxu0 0.0
    %1394 = vmatprep.subr.mxu0 0.0
    %1395 = vmatpush1.msra.mxu0 0.0
    %1396 = vmatprep.subr.mxu0 0.0
    %1397 = vmatpush1.msra.mxu0 0.0
    %1398 = vmatprep.subr.mxu0 0.0
    %1399 = vmatpush1.msra.mxu0 0.0
    %1400 = vmatprep.mubr.f32.mxu0 0.0
    %1401 = vmatmul.mubr.f32.gmra.mrb[0].mxu0 %v1330
    %v1402 = vpop.f32.mrb[0].mxu0
    %v1403 = vadd.f32 0.0, %v1402
    %v1404 = vpop.f32.mrb[0].mxu0
    %v1405 = vadd.f32 0.0, %v1404
    %1406 = vdwg.mxu0
    %1407 = vmatprep.subr.mxu0 %v396
    %1408 = vmatpush1.msra.mxu0 %v395
    %1409 = vmatprep.subr.mxu0 %v400
    %1410 = vmatpush1.msra.mxu0 %v399
    %1411 = vmatprep.subr.mxu0 %v404
    %1412 = vmatpush1.msra.mxu0 %v403
    %1413 = vmatprep.subr.mxu0 %v408
    %1414 = vmatpush1.msra.mxu0 %v407
    %1415 = vmatprep.subr.mxu0 %v412
    %1416 = vmatpush1.msra.mxu0 %v411
    %1417 = vmatprep.subr.mxu0 %v416
    %1418 = vmatpush1.msra.mxu0 %v415
    %1419 = vmatprep.subr.mxu0 %v420
    %1420 = vmatpush1.msra.mxu0 %v419
    %1421 = vmatprep.subr.mxu0 %v424
    %1422 = vmatpush1.msra.mxu0 %v423
    %1423 = vmatprep.subr.mxu0 %v428
    %1424 = vmatpush1.msra.mxu0 %v427
    %1425 = vmatprep.subr.mxu0 %v432
    %1426 = vmatpush1.msra.mxu0 %v431
    %1427 = vmatprep.subr.mxu0 %v436
    %1428 = vmatpush1.msra.mxu0 %v435
    %1429 = vmatprep.subr.mxu0 %v440
    %1430 = vmatpush1.msra.mxu0 %v439
    %1431 = vmatprep.subr.mxu0 %v444
    %1432 = vmatpush1.msra.mxu0 %v443
    %1433 = vmatprep.subr.mxu0 %v448
    %1434 = vmatpush1.msra.mxu0 %v447
    %1435 = vmatprep.subr.mxu0 %v452
    %1436 = vmatpush1.msra.mxu0 %v451
    %1437 = vmatprep.subr.mxu0 %v456
    %1438 = vmatpush1.msra.mxu0 %v455
    %1439 = vmatprep.subr.mxu0 0.0
    %1440 = vmatpush1.msra.mxu0 0.0
    %1441 = vmatprep.subr.mxu0 0.0
    %1442 = vmatpush1.msra.mxu0 0.0
    %1443 = vmatprep.subr.mxu0 0.0
    %1444 = vmatpush1.msra.mxu0 0.0
    %1445 = vmatprep.subr.mxu0 0.0
    %1446 = vmatpush1.msra.mxu0 0.0
    %1447 = vmatprep.subr.mxu0 0.0
    %1448 = vmatpush1.msra.mxu0 0.0
    %1449 = vmatprep.subr.mxu0 0.0
    %1450 = vmatpush1.msra.mxu0 0.0
    %1451 = vmatprep.subr.mxu0 0.0
    %1452 = vmatpush1.msra.mxu0 0.0
    %1453 = vmatprep.subr.mxu0 0.0
    %1454 = vmatpush1.msra.mxu0 0.0
    %1455 = vmatprep.subr.mxu0 0.0
    %1456 = vmatpush1.msra.mxu0 0.0
    %1457 = vmatprep.subr.mxu0 0.0
    %1458 = vmatpush1.msra.mxu0 0.0
    %1459 = vmatprep.subr.mxu0 0.0
    %1460 = vmatpush1.msra.mxu0 0.0
    %1461 = vmatprep.subr.mxu0 0.0
    %1462 = vmatpush1.msra.mxu0 0.0
    %1463 = vmatprep.subr.mxu0 0.0
    %1464 = vmatpush1.msra.mxu0 0.0
    %1465 = vmatprep.subr.mxu0 0.0
    %1466 = vmatpush1.msra.mxu0 0.0
    %1467 = vmatprep.subr.mxu0 0.0
    %1468 = vmatpush1.msra.mxu0 0.0
    %1469 = vmatprep.subr.mxu0 0.0
    %1470 = vmatpush1.msra.mxu0 0.0
    %1471 = vmatprep.mubr.f32.mxu0 0.0
    %1472 = vmatmul.mubr.f32.gmra.mrb[0].mxu0 %v1330
    %v1473 = vpop.f32.mrb[0].mxu0
    %v1474 = vadd.f32 0.0, %v1473
    %v1475 = vpop.f32.mrb[0].mxu0
    %v1476 = vadd.f32 0.0, %v1475
    %1477 = vdwg.mxu0
    %v1478 = vadd.f32 %v1332, %v1403
    %v1479 = vadd.f32 %v1333, %v1405
    %v1480 = vadd.f32 %v1334, %v1474
    %v1481 = vadd.f32 %v1335, %v1476
    %v1482 = vxor.u32 %v1478, 2147483648
    %v1483 = vmul.f32 %v1482, 1.442695
    %v1484 = vpow.pop %v1483
    %v1485 = vadd.f32 %v1484, 1.0
    %v1486 = vrcp.pop %v1485
    %v1487 = vmul.f32 1.0, %v1486
    %v1488 = vxor.u32 %v1479, 2147483648
    %v1489 = vmul.f32 %v1488, 1.442695
    %v1490 = vpow.pop %v1489
    %v1491 = vadd.f32 %v1490, 1.0
    %v1492 = vrcp.pop %v1491
    %v1493 = vmul.f32 1.0, %v1492
    %v1494 = vtanh.pop %v1480
    %v1495 = vxor.u32 %v1481, 2147483648
    %v1496 = vmul.f32 %v1495, 1.442695
    %v1497 = vpow.pop %v1496
    %v1498 = vadd.f32 %v1497, 1.0
    %v1499 = vrcp.pop %v1498
    %v1500 = vmul.f32 1.0, %v1499
    %v1501 = vmul.f32 %v1493, %v1328
    %v1502 = vmul.f32 %v1487, %v1494
    %v1503 = vadd.f32 %v1501, %v1502
    %v1504 = vtanh.pop %v1503
    %v1505 = vmul.f32 %v1500, %v1504
    %s1506 = scalar_lea.vmem [#allocation2], 192
    %v1507 = vld [vmem:[%s1506] sm:$0xff]
    %v1508 = vld [vmem:[%s1506 + $0x8] sm:$0xff]
    %v1509 = vld [vmem:[%s1506 + $0x10] sm:$0xff]
    %v1510 = vld [vmem:[%s1506 + $0x18] sm:$0xff]
    %1511 = vmatprep.subr.mxu0 %v394
    %1512 = vmatpush1.msra.mxu0 %v393
    %1513 = vmatprep.subr.mxu0 %v398
    %1514 = vmatpush1.msra.mxu0 %v397
    %1515 = vmatprep.subr.mxu0 %v402
    %1516 = vmatpush1.msra.mxu0 %v401
    %1517 = vmatprep.subr.mxu0 %v406
    %1518 = vmatpush1.msra.mxu0 %v405
    %1519 = vmatprep.subr.mxu0 %v410
    %1520 = vmatpush1.msra.mxu0 %v409
    %1521 = vmatprep.subr.mxu0 %v414
    %1522 = vmatpush1.msra.mxu0 %v413
    %1523 = vmatprep.subr.mxu0 %v418
    %1524 = vmatpush1.msra.mxu0 %v417
    %1525 = vmatprep.subr.mxu0 %v422
    %1526 = vmatpush1.msra.mxu0 %v421
    %1527 = vmatprep.subr.mxu0 %v426
    %1528 = vmatpush1.msra.mxu0 %v425
    %1529 = vmatprep.subr.mxu0 %v430
    %1530 = vmatpush1.msra.mxu0 %v429
    %1531 = vmatprep.subr.mxu0 %v434
    %1532 = vmatpush1.msra.mxu0 %v433
    %1533 = vmatprep.subr.mxu0 %v438
    %1534 = vmatpush1.msra.mxu0 %v437
    %1535 = vmatprep.subr.mxu0 %v442
    %1536 = vmatpush1.msra.mxu0 %v441
    %1537 = vmatprep.subr.mxu0 %v446
    %1538 = vmatpush1.msra.mxu0 %v445
    %1539 = vmatprep.subr.mxu0 %v450
    %1540 = vmatpush1.msra.mxu0 %v449
    %1541 = vmatprep.subr.mxu0 %v454
    %1542 = vmatpush1.msra.mxu0 %v453
    %1543 = vmatprep.subr.mxu0 0.0
    %1544 = vmatpush1.msra.mxu0 0.0
    %1545 = vmatprep.subr.mxu0 0.0
    %1546 = vmatpush1.msra.mxu0 0.0
    %1547 = vmatprep.subr.mxu0 0.0
    %1548 = vmatpush1.msra.mxu0 0.0
    %1549 = vmatprep.subr.mxu0 0.0
    %1550 = vmatpush1.msra.mxu0 0.0
    %1551 = vmatprep.subr.mxu0 0.0
    %1552 = vmatpush1.msra.mxu0 0.0
    %1553 = vmatprep.subr.mxu0 0.0
    %1554 = vmatpush1.msra.mxu0 0.0
    %1555 = vmatprep.subr.mxu0 0.0
    %1556 = vmatpush1.msra.mxu0 0.0
    %1557 = vmatprep.subr.mxu0 0.0
    %1558 = vmatpush1.msra.mxu0 0.0
    %1559 = vmatprep.subr.mxu0 0.0
    %1560 = vmatpush1.msra.mxu0 0.0
    %1561 = vmatprep.subr.mxu0 0.0
    %1562 = vmatpush1.msra.mxu0 0.0
    %1563 = vmatprep.subr.mxu0 0.0
    %1564 = vmatpush1.msra.mxu0 0.0
    %1565 = vmatprep.subr.mxu0 0.0
    %1566 = vmatpush1.msra.mxu0 0.0
    %1567 = vmatprep.subr.mxu0 0.0
    %1568 = vmatpush1.msra.mxu0 0.0
    %1569 = vmatprep.subr.mxu0 0.0
    %1570 = vmatpush1.msra.mxu0 0.0
    %1571 = vmatprep.subr.mxu0 0.0
    %1572 = vmatpush1.msra.mxu0 0.0
    %1573 = vmatprep.subr.mxu0 0.0
    %1574 = vmatpush1.msra.mxu0 0.0
    %1575 = vmatprep.mubr.f32.mxu0 0.0
    %1576 = vmatmul.mubr.f32.gmra.mrb[0].mxu0 %v1505
    %v1577 = vpop.f32.mrb[0].mxu0
    %v1578 = vadd.f32 0.0, %v1577
    %v1579 = vpop.f32.mrb[0].mxu0
    %v1580 = vadd.f32 0.0, %v1579
    %1581 = vdwg.mxu0
    %1582 = vmatprep.subr.mxu0 %v396
    %1583 = vmatpush1.msra.mxu0 %v395
    %1584 = vmatprep.subr.mxu0 %v400
    %1585 = vmatpush1.msra.mxu0 %v399
    %1586 = vmatprep.subr.mxu0 %v404
    %1587 = vmatpush1.msra.mxu0 %v403
    %1588 = vmatprep.subr.mxu0 %v408
    %1589 = vmatpush1.msra.mxu0 %v407
    %1590 = vmatprep.subr.mxu0 %v412
    %1591 = vmatpush1.msra.mxu0 %v411
    %1592 = vmatprep.subr.mxu0 %v416
    %1593 = vmatpush1.msra.mxu0 %v415
    %1594 = vmatprep.subr.mxu0 %v420
    %1595 = vmatpush1.msra.mxu0 %v419
    %1596 = vmatprep.subr.mxu0 %v424
    %1597 = vmatpush1.msra.mxu0 %v423
    %1598 = vmatprep.subr.mxu0 %v428
    %1599 = vmatpush1.msra.mxu0 %v427
    %1600 = vmatprep.subr.mxu0 %v432
    %1601 = vmatpush1.msra.mxu0 %v431
    %1602 = vmatprep.subr.mxu0 %v436
    %1603 = vmatpush1.msra.mxu0 %v435
    %1604 = vmatprep.subr.mxu0 %v440
    %1605 = vmatpush1.msra.mxu0 %v439
    %1606 = vmatprep.subr.mxu0 %v444
    %1607 = vmatpush1.msra.mxu0 %v443
    %1608 = vmatprep.subr.mxu0 %v448
    %1609 = vmatpush1.msra.mxu0 %v447
    %1610 = vmatprep.subr.mxu0 %v452
    %1611 = vmatpush1.msra.mxu0 %v451
    %1612 = vmatprep.subr.mxu0 %v456
    %1613 = vmatpush1.msra.mxu0 %v455
    %1614 = vmatprep.subr.mxu0 0.0
    %1615 = vmatpush1.msra.mxu0 0.0
    %1616 = vmatprep.subr.mxu0 0.0
    %1617 = vmatpush1.msra.mxu0 0.0
    %1618 = vmatprep.subr.mxu0 0.0
    %1619 = vmatpush1.msra.mxu0 0.0
    %1620 = vmatprep.subr.mxu0 0.0
    %1621 = vmatpush1.msra.mxu0 0.0
    %1622 = vmatprep.subr.mxu0 0.0
    %1623 = vmatpush1.msra.mxu0 0.0
    %1624 = vmatprep.subr.mxu0 0.0
    %1625 = vmatpush1.msra.mxu0 0.0
    %1626 = vmatprep.subr.mxu0 0.0
    %1627 = vmatpush1.msra.mxu0 0.0
    %1628 = vmatprep.subr.mxu0 0.0
    %1629 = vmatpush1.msra.mxu0 0.0
    %1630 = vmatprep.subr.mxu0 0.0
    %1631 = vmatpush1.msra.mxu0 0.0
    %1632 = vmatprep.subr.mxu0 0.0
    %1633 = vmatpush1.msra.mxu0 0.0
    %1634 = vmatprep.subr.mxu0 0.0
    %1635 = vmatpush1.msra.mxu0 0.0
    %1636 = vmatprep.subr.mxu0 0.0
    %1637 = vmatpush1.msra.mxu0 0.0
    %1638 = vmatprep.subr.mxu0 0.0
    %1639 = vmatpush1.msra.mxu0 0.0
    %1640 = vmatprep.subr.mxu0 0.0
    %1641 = vmatpush1.msra.mxu0 0.0
    %1642 = vmatprep.subr.mxu0 0.0
    %1643 = vmatpush1.msra.mxu0 0.0
    %1644 = vmatprep.subr.mxu0 0.0
    %1645 = vmatpush1.msra.mxu0 0.0
    %1646 = vmatprep.mubr.f32.mxu0 0.0
    %1647 = vmatmul.mubr.f32.gmra.mrb[0].mxu0 %v1505
    %v1648 = vpop.f32.mrb[0].mxu0
    %v1649 = vadd.f32 0.0, %v1648
    %v1650 = vpop.f32.mrb[0].mxu0
    %v1651 = vadd.f32 0.0, %v1650
    %1652 = vdwg.mxu0
    %v1653 = vadd.f32 %v1507, %v1578
    %v1654 = vadd.f32 %v1508, %v1580
    %v1655 = vadd.f32 %v1509, %v1649
    %v1656 = vadd.f32 %v1510, %v1651
    %v1657 = vxor.u32 %v1653, 2147483648
    %v1658 = vmul.f32 %v1657, 1.442695
    %v1659 = vpow.pop %v1658
    %v1660 = vadd.f32 %v1659, 1.0
    %v1661 = vrcp.pop %v1660
    %v1662 = vmul.f32 1.0, %v1661
    %v1663 = vxor.u32 %v1654, 2147483648
    %v1664 = vmul.f32 %v1663, 1.442695
    %v1665 = vpow.pop %v1664
    %v1666 = vadd.f32 %v1665, 1.0
    %v1667 = vrcp.pop %v1666
    %v1668 = vmul.f32 1.0, %v1667
    %v1669 = vtanh.pop %v1655
    %v1670 = vxor.u32 %v1656, 2147483648
    %v1671 = vmul.f32 %v1670, 1.442695
    %v1672 = vpow.pop %v1671
    %v1673 = vadd.f32 %v1672, 1.0
    %v1674 = vrcp.pop %v1673
    %v1675 = vmul.f32 1.0, %v1674
    %v1676 = vmul.f32 %v1668, %v1503
    %v1677 = vmul.f32 %v1662, %v1669
    %v1678 = vadd.f32 %v1676, %v1677
    %v1679 = vtanh.pop %v1678
    %v1680 = vmul.f32 %v1675, %v1679
    %s1681 = scalar_lea.vmem [#allocation2], 224
    %v1682 = vld [vmem:[%s1681] sm:$0xff]
    %v1683 = vld [vmem:[%s1681 + $0x8] sm:$0xff]
    %v1684 = vld [vmem:[%s1681 + $0x10] sm:$0xff]
    %v1685 = vld [vmem:[%s1681 + $0x18] sm:$0xff]
    %1686 = vmatprep.subr.mxu0 %v394
    %1687 = vmatpush1.msra.mxu0 %v393
    %1688 = vmatprep.subr.mxu0 %v398
    %1689 = vmatpush1.msra.mxu0 %v397
    %1690 = vmatprep.subr.mxu0 %v402
    %1691 = vmatpush1.msra.mxu0 %v401
    %1692 = vmatprep.subr.mxu0 %v406
    %1693 = vmatpush1.msra.mxu0 %v405
    %1694 = vmatprep.subr.mxu0 %v410
    %1695 = vmatpush1.msra.mxu0 %v409
    %1696 = vmatprep.subr.mxu0 %v414
    %1697 = vmatpush1.msra.mxu0 %v413
    %1698 = vmatprep.subr.mxu0 %v418
    %1699 = vmatpush1.msra.mxu0 %v417
    %1700 = vmatprep.subr.mxu0 %v422
    %1701 = vmatpush1.msra.mxu0 %v421
    %1702 = vmatprep.subr.mxu0 %v426
    %1703 = vmatpush1.msra.mxu0 %v425
    %1704 = vmatprep.subr.mxu0 %v430
    %1705 = vmatpush1.msra.mxu0 %v429
    %1706 = vmatprep.subr.mxu0 %v434
    %1707 = vmatpush1.msra.mxu0 %v433
    %1708 = vmatprep.subr.mxu0 %v438
    %1709 = vmatpush1.msra.mxu0 %v437
    %1710 = vmatprep.subr.mxu0 %v442
    %1711 = vmatpush1.msra.mxu0 %v441
    %1712 = vmatprep.subr.mxu0 %v446
    %1713 = vmatpush1.msra.mxu0 %v445
    %1714 = vmatprep.subr.mxu0 %v450
    %1715 = vmatpush1.msra.mxu0 %v449
    %1716 = vmatprep.subr.mxu0 %v454
    %1717 = vmatpush1.msra.mxu0 %v453
    %1718 = vmatprep.subr.mxu0 0.0
    %1719 = vmatpush1.msra.mxu0 0.0
    %1720 = vmatprep.subr.mxu0 0.0
    %1721 = vmatpush1.msra.mxu0 0.0
    %1722 = vmatprep.subr.mxu0 0.0
    %1723 = vmatpush1.msra.mxu0 0.0
    %1724 = vmatprep.subr.mxu0 0.0
    %1725 = vmatpush1.msra.mxu0 0.0
    %1726 = vmatprep.subr.mxu0 0.0
    %1727 = vmatpush1.msra.mxu0 0.0
    %1728 = vmatprep.subr.mxu0 0.0
    %1729 = vmatpush1.msra.mxu0 0.0
    %1730 = vmatprep.subr.mxu0 0.0
    %1731 = vmatpush1.msra.mxu0 0.0
    %1732 = vmatprep.subr.mxu0 0.0
    %1733 = vmatpush1.msra.mxu0 0.0
    %1734 = vmatprep.subr.mxu0 0.0
    %1735 = vmatpush1.msra.mxu0 0.0
    %1736 = vmatprep.subr.mxu0 0.0
    %1737 = vmatpush1.msra.mxu0 0.0
    %1738 = vmatprep.subr.mxu0 0.0
    %1739 = vmatpush1.msra.mxu0 0.0
    %1740 = vmatprep.subr.mxu0 0.0
    %1741 = vmatpush1.msra.mxu0 0.0
    %1742 = vmatprep.subr.mxu0 0.0
    %1743 = vmatpush1.msra.mxu0 0.0
    %1744 = vmatprep.subr.mxu0 0.0
    %1745 = vmatpush1.msra.mxu0 0.0
    %1746 = vmatprep.subr.mxu0 0.0
    %1747 = vmatpush1.msra.mxu0 0.0
    %1748 = vmatprep.subr.mxu0 0.0
    %1749 = vmatpush1.msra.mxu0 0.0
    %1750 = vmatprep.mubr.f32.mxu0 0.0
    %1751 = vmatmul.mubr.f32.gmra.mrb[0].mxu0 %v1680
    %v1752 = vpop.f32.mrb[0].mxu0
    %v1753 = vadd.f32 0.0, %v1752
    %v1754 = vpop.f32.mrb[0].mxu0
    %v1755 = vadd.f32 0.0, %v1754
    %1756 = vdwg.mxu0
    %1757 = vmatprep.subr.mxu0 %v396
    %1758 = vmatpush1.msra.mxu0 %v395
    %1759 = vmatprep.subr.mxu0 %v400
    %1760 = vmatpush1.msra.mxu0 %v399
    %1761 = vmatprep.subr.mxu0 %v404
    %1762 = vmatpush1.msra.mxu0 %v403
    %1763 = vmatprep.subr.mxu0 %v408
    %1764 = vmatpush1.msra.mxu0 %v407
    %1765 = vmatprep.subr.mxu0 %v412
    %1766 = vmatpush1.msra.mxu0 %v411
    %1767 = vmatprep.subr.mxu0 %v416
    %1768 = vmatpush1.msra.mxu0 %v415
    %1769 = vmatprep.subr.mxu0 %v420
    %1770 = vmatpush1.msra.mxu0 %v419
    %1771 = vmatprep.subr.mxu0 %v424
    %1772 = vmatpush1.msra.mxu0 %v423
    %1773 = vmatprep.subr.mxu0 %v428
    %1774 = vmatpush1.msra.mxu0 %v427
    %1775 = vmatprep.subr.mxu0 %v432
    %1776 = vmatpush1.msra.mxu0 %v431
    %1777 = vmatprep.subr.mxu0 %v436
    %1778 = vmatpush1.msra.mxu0 %v435
    %1779 = vmatprep.subr.mxu0 %v440
    %1780 = vmatpush1.msra.mxu0 %v439
    %1781 = vmatprep.subr.mxu0 %v444
    %1782 = vmatpush1.msra.mxu0 %v443
    %1783 = vmatprep.subr.mxu0 %v448
    %1784 = vmatpush1.msra.mxu0 %v447
    %1785 = vmatprep.subr.mxu0 %v452
    %1786 = vmatpush1.msra.mxu0 %v451
    %1787 = vmatprep.subr.mxu0 %v456
    %1788 = vmatpush1.msra.mxu0 %v455
    %1789 = vmatprep.subr.mxu0 0.0
    %1790 = vmatpush1.msra.mxu0 0.0
    %1791 = vmatprep.subr.mxu0 0.0
    %1792 = vmatpush1.msra.mxu0 0.0
    %1793 = vmatprep.subr.mxu0 0.0
    %1794 = vmatpush1.msra.mxu0 0.0
    %1795 = vmatprep.subr.mxu0 0.0
    %1796 = vmatpush1.msra.mxu0 0.0
    %1797 = vmatprep.subr.mxu0 0.0
    %1798 = vmatpush1.msra.mxu0 0.0
    %1799 = vmatprep.subr.mxu0 0.0
    %1800 = vmatpush1.msra.mxu0 0.0
    %1801 = vmatprep.subr.mxu0 0.0
    %1802 = vmatpush1.msra.mxu0 0.0
    %1803 = vmatprep.subr.mxu0 0.0
    %1804 = vmatpush1.msra.mxu0 0.0
    %1805 = vmatprep.subr.mxu0 0.0
    %1806 = vmatpush1.msra.mxu0 0.0
    %1807 = vmatprep.subr.mxu0 0.0
    %1808 = vmatpush1.msra.mxu0 0.0
    %1809 = vmatprep.subr.mxu0 0.0
    %1810 = vmatpush1.msra.mxu0 0.0
    %1811 = vmatprep.subr.mxu0 0.0
    %1812 = vmatpush1.msra.mxu0 0.0
    %1813 = vmatprep.subr.mxu0 0.0
    %1814 = vmatpush1.msra.mxu0 0.0
    %1815 = vmatprep.subr.mxu0 0.0
    %1816 = vmatpush1.msra.mxu0 0.0
    %1817 = vmatprep.subr.mxu0 0.0
    %1818 = vmatpush1.msra.mxu0 0.0
    %1819 = vmatprep.subr.mxu0 0.0
    %1820 = vmatpush1.msra.mxu0 0.0
    %1821 = vmatprep.mubr.f32.mxu0 0.0
    %1822 = vmatmul.mubr.f32.gmra.mrb[0].mxu0 %v1680
    %v1823 = vpop.f32.mrb[0].mxu0
    %v1824 = vadd.f32 0.0, %v1823
    %v1825 = vpop.f32.mrb[0].mxu0
    %v1826 = vadd.f32 0.0, %v1825
    %1827 = vdwg.mxu0
    %v1828 = vadd.f32 %v1682, %v1753
    %v1829 = vadd.f32 %v1683, %v1755
    %v1830 = vadd.f32 %v1684, %v1824
    %v1831 = vadd.f32 %v1685, %v1826
    %v1832 = vxor.u32 %v1828, 2147483648
    %v1833 = vmul.f32 %v1832, 1.442695
    %v1834 = vpow.pop %v1833
    %v1835 = vadd.f32 %v1834, 1.0
    %v1836 = vrcp.pop %v1835
    %v1837 = vmul.f32 1.0, %v1836
    %v1838 = vxor.u32 %v1829, 2147483648
    %v1839 = vmul.f32 %v1838, 1.442695
    %v1840 = vpow.pop %v1839
    %v1841 = vadd.f32 %v1840, 1.0
    %v1842 = vrcp.pop %v1841
    %v1843 = vmul.f32 1.0, %v1842
    %v1844 = vtanh.pop %v1830
    %v1845 = vxor.u32 %v1831, 2147483648
    %v1846 = vmul.f32 %v1845, 1.442695
    %v1847 = vpow.pop %v1846
    %v1848 = vadd.f32 %v1847, 1.0
    %v1849 = vrcp.pop %v1848
    %v1850 = vmul.f32 1.0, %v1849
    %v1851 = vmul.f32 %v1843, %v1678
    %v1852 = vmul.f32 %v1837, %v1844
    %v1853 = vadd.f32 %v1851, %v1852
    %v1854 = vtanh.pop %v1853
    %v1855 = vmul.f32 %v1850, %v1854
    %v1856 = vld [vmem:[#allocation6] sm:$0xff]
    %v1857 = vld [vmem:[#allocation6 + $0x8] sm:$0xff]
    %v1858 = vld [vmem:[#allocation6 + $0x10] sm:$0xff]
    %v1859 = vld [vmem:[#allocation6 + $0x18] sm:$0xff]
    %v1860 = vld [vmem:[#allocation6 + $0x20] sm:$0xff]
    %v1861 = vld [vmem:[#allocation6 + $0x28] sm:$0xff]
    %v1862 = vld [vmem:[#allocation6 + $0x30] sm:$0xff]
    %v1863 = vld [vmem:[#allocation6 + $0x38] sm:$0xff]
    %v1864 = vld [vmem:[#allocation6 + $0x40] sm:$0xff]
    %v1865 = vld [vmem:[#allocation6 + $0x48] sm:$0xff]
    %v1866 = vld [vmem:[#allocation6 + $0x50] sm:$0xff]
    %v1867 = vld [vmem:[#allocation6 + $0x58] sm:$0xff]
    %v1868 = vld [vmem:[#allocation6 + $0x60] sm:$0xff]
    %v1869 = vld [vmem:[#allocation6 + $0x68] sm:$0xff]
    %v1870 = vld [vmem:[#allocation6 + $0x70] sm:$0xff]
    %v1871 = vld [vmem:[#allocation6 + $0x78] sm:$0xff]
    %v1872 = vld [vmem:[%s5] sm:$0x1]
    %v1874 = vlaneseq
    %v1875 = vshrl.u32 %v1874, 7
    %v1876 = vsub.s32 0, %v1875
    %v1877 = vrot.slane %v1872, %v1876
    %1879 = vmatprep.subr.mxu0 0.0
    %1880 = vmatpush1.msra.mxu0 %v1856
    %1881 = vmatprep.subr.mxu0 0.0
    %1882 = vmatpush1.msra.mxu0 %v1857
    %1883 = vmatprep.subr.mxu0 0.0
    %1884 = vmatpush1.msra.mxu0 %v1858
    %1885 = vmatprep.subr.mxu0 0.0
    %1886 = vmatpush1.msra.mxu0 %v1859
    %1887 = vmatprep.subr.mxu0 0.0
    %1888 = vmatpush1.msra.mxu0 %v1860
    %1889 = vmatprep.subr.mxu0 0.0
    %1890 = vmatpush1.msra.mxu0 %v1861
    %1891 = vmatprep.subr.mxu0 0.0
    %1892 = vmatpush1.msra.mxu0 %v1862
    %1893 = vmatprep.subr.mxu0 0.0
    %1894 = vmatpush1.msra.mxu0 %v1863
    %1895 = vmatprep.subr.mxu0 0.0
    %1896 = vmatpush1.msra.mxu0 %v1864
    %1897 = vmatprep.subr.mxu0 0.0
    %1898 = vmatpush1.msra.mxu0 %v1865
    %1899 = vmatprep.subr.mxu0 0.0
    %1900 = vmatpush1.msra.mxu0 %v1866
    %1901 = vmatprep.subr.mxu0 0.0
    %1902 = vmatpush1.msra.mxu0 %v1867
    %1903 = vmatprep.subr.mxu0 0.0
    %1904 = vmatpush1.msra.mxu0 %v1868
    %1905 = vmatprep.subr.mxu0 0.0
    %1906 = vmatpush1.msra.mxu0 %v1869
    %1907 = vmatprep.subr.mxu0 0.0
    %1908 = vmatpush1.msra.mxu0 %v1870
    %1909 = vmatprep.subr.mxu0 0.0
    %1910 = vmatpush1.msra.mxu0 %v1871
    %1911 = vmatprep.subr.mxu0 0.0
    %1912 = vmatpush1.msra.mxu0 0.0
    %1913 = vmatprep.subr.mxu0 0.0
    %1914 = vmatpush1.msra.mxu0 0.0
    %1915 = vmatprep.subr.mxu0 0.0
    %1916 = vmatpush1.msra.mxu0 0.0
    %1917 = vmatprep.subr.mxu0 0.0
    %1918 = vmatpush1.msra.mxu0 0.0
    %1919 = vmatprep.subr.mxu0 0.0
    %1920 = vmatpush1.msra.mxu0 0.0
    %1921 = vmatprep.subr.mxu0 0.0
    %1922 = vmatpush1.msra.mxu0 0.0
    %1923 = vmatprep.subr.mxu0 0.0
    %1924 = vmatpush1.msra.mxu0 0.0
    %1925 = vmatprep.subr.mxu0 0.0
    %1926 = vmatpush1.msra.mxu0 0.0
    %1927 = vmatprep.subr.mxu0 0.0
    %1928 = vmatpush1.msra.mxu0 0.0
    %1929 = vmatprep.subr.mxu0 0.0
    %1930 = vmatpush1.msra.mxu0 0.0
    %1931 = vmatprep.subr.mxu0 0.0
    %1932 = vmatpush1.msra.mxu0 0.0
    %1933 = vmatprep.subr.mxu0 0.0
    %1934 = vmatpush1.msra.mxu0 0.0
    %1935 = vmatprep.subr.mxu0 0.0
    %1936 = vmatpush1.msra.mxu0 0.0
    %1937 = vmatprep.subr.mxu0 0.0
    %1938 = vmatpush1.msra.mxu0 0.0
    %1939 = vmatprep.subr.mxu0 0.0
    %1940 = vmatpush1.msra.mxu0 0.0
    %1941 = vmatprep.subr.mxu0 0.0
    %1942 = vmatpush1.msra.mxu0 0.0
    %1943 = vmatprep.mubr.f32.mxu0 0.0
    %1944 = vmatmul.mubr.f32.gmra.mrb[0].mxu0 %v1855
    %v1945 = vpop.f32.mrb[0].mxu0
    %v1946 = vadd.f32 %v1877, %v1945
    %v1947 = vpop.f32.mrb[0].mxu0
    %1948 = vdwg.mxu0
    %1949 = vst [vmem:[#allocation8] sm:$0xff] %v1946
    // Predicated region
    $region34: #{tpu_custom_call.1} parent=1 // pred_check
      _
    $region35: #{tpu_custom_call.1} parent=1 // pred_check_branch
      %1951 = sbr.rel (0) target = $region37
    $region36: #{tpu_custom_call.1} parent=1 // pred_region
      %s1953 = ssub.s32 128, 128
      %1954 = vsyncadd [#allocation5], %s1953
      %s1956 = sshll.u32 [#allocation8], 4
      %s1957 = int_to_ptr.vmem [resolvable:$true] %s1956
      %1959 = dma.vmem_to_hbm [thread:$0]  %s1957, 128, %s6, [#allocation5]
    $region37: #{tpu_custom_call.1} parent=1 // pred_fallthru
      _
    // Predicated region
    $region38: #{tpu_custom_call.1} parent=1 // pred_check
      _
    $region39: #{tpu_custom_call.1} parent=1 // pred_check_branch
      %1961 = sbr.rel (0) target = $region41
    $region40: #{tpu_custom_call.1} parent=1 // pred_region
      %1962 = dma.done [#allocation5], 128
    $region41: #{tpu_custom_call.1} parent=1 // pred_fallthru
      _
    %1963 = vsyncpa [#allocation4], 1
    %1964 = vsyncpa [#allocation7], 1
    %1965 = vsyncpa [#allocation5], 1

</llo_original>
